<compile_context>
chip_gen: v7x
topology: tpu7x:2x2x1
jax: 0.10.0
libtpu: 0.0.40
codegen_flags: <defaults>
</compile_context>

<pallas_src>
import functools

import jax
import jax.numpy as jnp
from jax.experimental import pallas as pl
from jax.experimental.pallas import tpu as pltpu

# ---------------- config (small but lane-dense synthetic T5 config) ----------
B = 2          # batch
S = 128        # seq length            -> B*S = 256 rows
D = 128        # d_model               (multiple of 128: lane-dense stores)
FF = 512       # d_ff
TFF = 256      # FF chunk per reduction step (multiple of 128; ~512 at real sizes)
TM = 128       # row tile              -> 2 row-parallel grid steps (v7x: 2 TCs)
EPS = 1e-6
SQRT_2_OVER_PI = 0.7978845608028654


# ---------------- Pallas kernel ----------------
def t5_layer_ff_kernel(x_ref, ln_ref, wi_ref, wo_ref, out_ref,
                       normed_ref, acc_ref, *, tff, eps):
    k = pl.program_id(1)

    # Per row tile (first FF chunk): RMSNorm once, cache bf16 normed, zero acc.
    @pl.when(k == 0)
    def _():
        x = x_ref[...]                                        # [TM, D] f32
        var = jnp.mean(x * x, axis=-1, keepdims=True)
        normed = ln_ref[...] * (x * jax.lax.rsqrt(var + eps)) # T5LayerNorm (no mean, no bias)
        normed_ref[...] = normed.astype(jnp.bfloat16)         # bf16 only at the MXU input
        acc_ref[...] = jnp.zeros_like(acc_ref)

    normed = normed_ref[...]                                  # [TM, D] bf16

    # Fused up-projection for this FF chunk: [TM, D] @ [D, 2*TFF] (bf16 in, f32 acc).
    gl = jnp.dot(normed, wi_ref[0], preferred_element_type=jnp.float32)  # [TM, 2*TFF]
    g = gl[:, :tff]                                           # wi_0 half (lane-aligned split)
    lin = gl[:, tff:]                                         # wi_1 half

    # gelu_new: 0.5*x*(1+tanh(sqrt(2/pi)*(x+0.044715*x^3)))  (f32 elementwise)
    g = 0.5 * g * (1.0 + jnp.tanh(SQRT_2_OVER_PI * (g + 0.044715 * g * g * g)))

    # Gated chunk -> down-projection chunk, accumulated in f32 VMEM scratch.
    h = (g * lin).astype(jnp.bfloat16)                        # [TM, TFF]
    acc_ref[...] += jnp.dot(h, wo_ref[0], preferred_element_type=jnp.float32)

    # Finalize: residual add + one lane-dense store per row tile.
    @pl.when(k == pl.num_programs(1) - 1)
    def _():
        out_ref[...] = (x_ref[...] + acc_ref[...]).astype(out_ref.dtype)


# ---------------- parameter pre-fusion (done once, outside the forward path) --
def prefuse_ffn_weights(wi0, wi1, wo, *, tff):
    """Fuse wi_0|wi_1 into chunked [NK, D, 2*TFF] bf16 and chunk wo to [NK, TFF, D] bf16."""
    d, ff = wi0.shape
    assert ff % tff == 0 and tff % 128 == 0, "FF chunk must be a lane-aligned divisor of d_ff"
    nk = ff // tff
    wi0_c = wi0.reshape(d, nk, tff).transpose(1, 0, 2)        # [NK, D, TFF]
    wi1_c = wi1.reshape(d, nk, tff).transpose(1, 0, 2)        # [NK, D, TFF]
    wi_fused = jnp.concatenate([wi0_c, wi1_c], axis=-1).astype(jnp.bfloat16)  # [NK, D, 2*TFF]
    wo_c = wo.reshape(nk, tff, d).astype(jnp.bfloat16)        # [NK, TFF, D]
    return wi_fused, wo_c


# ---------------- wrapper ----------------
def t5_layer_ff_pallas(x, ln_w, wi_fused, wo_chunks, *, eps=EPS, tile_rows=TM,
                       vmem_limit_bytes=64 * 1024 * 1024):
    b, s, d = x.shape
    n = b * s
    nk, d_w, two_tff = wi_fused.shape
    assert d_w == d
    tff = two_tff // 2

    xf = x.reshape(n, d).astype(jnp.float32)
    ln2d = ln_w.reshape(1, d).astype(jnp.float32)

    tm = min(n, tile_rows)
    assert n % tm == 0 and (tm == n or tm % 8 == 0)

    kernel = functools.partial(t5_layer_ff_kernel, tff=tff, eps=eps)
    out = pl.pallas_call(
        kernel,
        out_shape=jax.ShapeDtypeStruct((n, d), jnp.float32),
        grid_spec=pltpu.PrefetchScalarGridSpec(
            num_scalar_prefetch=0,
            grid=(n // tm, nk),                                # rows (parallel), FF chunks (reduction)
            in_specs=[
                pl.BlockSpec((tm, d), lambda i, k: (i, 0)),            # x: constant over k (no re-DMA)
                pl.BlockSpec((1, d), lambda i, k: (0, 0)),             # RMSNorm weight (resident)
                pl.BlockSpec((1, d, two_tff), lambda i, k: (k, 0, 0)), # fused wi chunk (streamed, bf16)
                pl.BlockSpec((1, tff, d), lambda i, k: (k, 0, 0)),     # wo chunk (streamed, bf16)
            ],
            out_specs=pl.BlockSpec((tm, d), lambda i, k: (i, 0)),      # written once, at k == last
            scratch_shapes=[
                pltpu.VMEM((tm, d), jnp.bfloat16),   # cached normed activations
                pltpu.VMEM((tm, d), jnp.float32),    # f32 accumulator
            ],
        ),
        compiler_params=pltpu.CompilerParams(
            dimension_semantics=("parallel", "arbitrary"),
            # Matters at real T5 sizes (d_ff >= 2816): default scoped limit would
            # force undersized tiles long before physical VMEM is exhausted.
            vmem_limit_bytes=vmem_limit_bytes,
        ),
    )(xf, ln2d, wi_fused, wo_chunks)
    return out.reshape(b, s, d)


# ---------------- pure-JAX reference (f32, matches the PyTorch module) -------
def t5_layer_ff_ref(x, ln_w, wi0, wi1, wo, eps=EPS):
    xf = x.astype(jnp.float32)
    var = jnp.mean(xf * xf, axis=-1, keepdims=True)
    normed = ln_w * (xf * jax.lax.rsqrt(var + eps))
    g = normed @ wi0
    g = 0.5 * g * (1.0 + jnp.tanh(SQRT_2_OVER_PI * (g + 0.044715 * g ** 3)))
    lin = normed @ wi1
    ff = (g * lin) @ wo
    return xf + ff


# ---------------- main ----------------
if __name__ == "__main__":
    key = jax.random.PRNGKey(0)
    keys = jax.random.split(key, 6)

    x = jax.random.normal(keys[0], (B, S, D), dtype=jnp.float32)

    # deterministic parameter init (T5 shapes, no biases)
    wi0 = jax.random.normal(keys[1], (D, FF), dtype=jnp.float32) * 0.05
    wi1 = jax.random.normal(keys[2], (D, FF), dtype=jnp.float32) * 0.05
    wo = jax.random.normal(keys[3], (FF, D), dtype=jnp.float32) * 0.02
    ln_w = 1.0 + 0.1 * jax.random.normal(keys[4], (D,), dtype=jnp.float32)

    # Weight fusion / chunking / bf16 cast happens once at "parameter init",
    # not on every forward call.
    wi_fused, wo_chunks = prefuse_ffn_weights(wi0, wi1, wo, tff=TFF)

    out = t5_layer_ff_pallas(x, ln_w, wi_fused, wo_chunks)
    out = jax.block_until_ready(out)

    ref = t5_layer_ff_ref(x, ln_w, wi0, wi1, wo)
    assert out.shape == (B, S, D)
    # bf16 MXU operands (f32 accumulation) vs. the f32 reference: ~1e-3 abs error.
    assert jnp.allclose(out, ref, atol=1e-2, rtol=1e-2), "mismatch vs reference"

    print("KERNEL_OK")
</pallas_src>

<mosaic_0001>
module attributes {stable_mosaic.version = 11 : i64} {
  func.func @t5_layer_ff_kernel(%arg0: i32, %arg1: i32, %arg2: memref<128x128xf32, #tpu.memory_space<vmem>>, %arg3: memref<1x128xf32, #tpu.memory_space<vmem>>, %arg4: memref<1x128x512xbf16, #tpu.memory_space<vmem>>, %arg5: memref<1x256x128xbf16, #tpu.memory_space<vmem>>, %arg6: memref<128x128xf32, #tpu.memory_space<vmem>>, %arg7: memref<128x128xbf16, #tpu.memory_space<vmem>>, %arg8: memref<128x128xf32, #tpu.memory_space<vmem>>) attributes {dimension_semantics = [#tpu.dimension_semantics<parallel>, #tpu.dimension_semantics<arbitrary>], iteration_bounds = array<i64: 2, 2>, scalar_prefetch = 0 : i64, scratch_operands = 2 : i64, tpu.core_type = #tpu.core_type<tc>, window_params = [{transform_indices = @transform_0, window_bounds = array<i64: 128, 128>}, {pipeline_mode = #tpu.pipeline_mode<synchronous>, transform_indices = @transform_1, window_bounds = array<i64: 1, 128>}, {transform_indices = @transform_2, window_bounds = array<i64: 1, 128, 512>}, {transform_indices = @transform_3, window_bounds = array<i64: 1, 256, 128>}, {transform_indices = @transform_4, window_bounds = array<i64: 128, 128>}]} {
    %c0_i32 = arith.constant 0 : i32
    %0 = arith.cmpi eq, %arg1, %c0_i32 : i32
    %1 = arith.extui %0 : i1 to i32
    %c0_i32_0 = arith.constant 0 : i32
    %2 = arith.cmpi ne, %1, %c0_i32_0 : i32
    scf.if %2 {
      %c0_18 = arith.constant 0 : index
      %c0_19 = arith.constant 0 : index
      %33 = vector.load %arg2[%c0_18, %c0_19] : memref<128x128xf32, #tpu.memory_space<vmem>>, vector<128x128xf32>
      %34 = arith.mulf %33, %33 : vector<128x128xf32>
      %cst_20 = arith.constant dense<0.000000e+00> : vector<128xf32>
      %35 = vector.multi_reduction <add>, %34, %cst_20 [1] : vector<128x128xf32> to vector<128xf32>
      %36 = vector.shape_cast %35 : vector<128xf32> to vector<128x1xf32>
      %cst_21 = arith.constant 1.280000e+02 : f32
      %37 = vector.broadcast %cst_21 : f32 to vector<128x1xf32>
      %38 = arith.divf %36, %37 : vector<128x1xf32>
      %c0_22 = arith.constant 0 : index
      %c0_23 = arith.constant 0 : index
      %39 = vector.load %arg3[%c0_22, %c0_23] : memref<1x128xf32, #tpu.memory_space<vmem>>, vector<1x128xf32>
      %cst_24 = arith.constant 9.99999997E-7 : f32
      %40 = vector.broadcast %cst_24 : f32 to vector<128x1xf32>
      %41 = arith.addf %38, %40 : vector<128x1xf32>
      %42 = math.rsqrt %41 : vector<128x1xf32>
      %43 = vector.broadcast %42 : vector<128x1xf32> to vector<128x128xf32>
      %44 = arith.mulf %33, %43 : vector<128x128xf32>
      %45 = vector.broadcast %39 : vector<1x128xf32> to vector<128x128xf32>
      %46 = arith.mulf %45, %44 : vector<128x128xf32>
      %47 = arith.truncf %46 : vector<128x128xf32> to vector<128x128xbf16>
      %c0_25 = arith.constant 0 : index
      %c0_26 = arith.constant 0 : index
      %48 = vector.load %arg7[%c0_25, %c0_26] : memref<128x128xbf16, #tpu.memory_space<vmem>>, vector<128x128xbf16>
      tpu.vector_store %arg7[%c0_25, %c0_26], %47 {strides = array<i32>} : memref<128x128xbf16, #tpu.memory_space<vmem>>, vector<128x128xbf16>,
      %cst_27 = arith.constant 0.000000e+00 : f32
      %49 = vector.broadcast %cst_27 : f32 to vector<128x128xf32>
      %c0_28 = arith.constant 0 : index
      %c0_29 = arith.constant 0 : index
      %50 = vector.load %arg8[%c0_28, %c0_29] : memref<128x128xf32, #tpu.memory_space<vmem>>, vector<128x128xf32>
      tpu.vector_store %arg8[%c0_28, %c0_29], %49 {strides = array<i32>} : memref<128x128xf32, #tpu.memory_space<vmem>>, vector<128x128xf32>,
    } else {
    }
    %c0 = arith.constant 0 : index
    %c0_1 = arith.constant 0 : index
    %3 = vector.load %arg7[%c0, %c0_1] : memref<128x128xbf16, #tpu.memory_space<vmem>>, vector<128x128xbf16>
    %c0_2 = arith.constant 0 : index
    %c0_3 = arith.constant 0 : index
    %c0_4 = arith.constant 0 : index
    %4 = vector.load %arg4[%c0_2, %c0_3, %c0_4] : memref<1x128x512xbf16, #tpu.memory_space<vmem>>, vector<1x128x512xbf16>
    %5 = vector.shape_cast %4 : vector<1x128x512xbf16> to vector<128x512xbf16>
    %cst = arith.constant dense<0.000000e+00> : vector<128x512xf32>
    %6 = tpu.matmul %3, %5, %cst {dimension_numbers = #tpu.dot_dimension_numbers<[1], [0], [0], [1], [0, 0, 1, 1], [], []>} : vector<128x128xbf16>, vector<128x512xbf16>, vector<128x512xf32> -> vector<128x512xf32>
    %7 = vector.extract_strided_slice %6 {offsets = [0, 0], sizes = [128, 256], strides = [1, 1]} : vector<128x512xf32> to vector<128x256xf32>
    %8 = vector.extract_strided_slice %6 {offsets = [0, 256], sizes = [128, 256], strides = [1, 1]} : vector<128x512xf32> to vector<128x256xf32>
    %cst_5 = arith.constant 5.000000e-01 : f32
    %9 = vector.broadcast %cst_5 : f32 to vector<128x256xf32>
    %10 = arith.mulf %9, %7 : vector<128x256xf32>
    %cst_6 = arith.constant 4.471500e-02 : f32
    %11 = vector.broadcast %cst_6 : f32 to vector<128x256xf32>
    %12 = arith.mulf %11, %7 : vector<128x256xf32>
    %13 = arith.mulf %12, %7 : vector<128x256xf32>
    %14 = arith.mulf %13, %7 : vector<128x256xf32>
    %15 = arith.addf %7, %14 : vector<128x256xf32>
    %cst_7 = arith.constant 0.797884583 : f32
    %16 = vector.broadcast %cst_7 : f32 to vector<128x256xf32>
    %17 = arith.mulf %16, %15 : vector<128x256xf32>
    %18 = math.tanh %17 : vector<128x256xf32>
    %cst_8 = arith.constant 1.000000e+00 : f32
    %19 = vector.broadcast %cst_8 : f32 to vector<128x256xf32>
    %20 = arith.addf %19, %18 : vector<128x256xf32>
    %21 = arith.mulf %10, %20 : vector<128x256xf32>
    %22 = arith.mulf %21, %8 : vector<128x256xf32>
    %23 = arith.truncf %22 : vector<128x256xf32> to vector<128x256xbf16>
    %c0_9 = arith.constant 0 : index
    %c0_10 = arith.constant 0 : index
    %24 = vector.load %arg8[%c0_9, %c0_10] : memref<128x128xf32, #tpu.memory_space<vmem>>, vector<128x128xf32>
    %c0_11 = arith.constant 0 : index
    %c0_12 = arith.constant 0 : index
    %c0_13 = arith.constant 0 : index
    %25 = vector.load %arg5[%c0_11, %c0_12, %c0_13] : memref<1x256x128xbf16, #tpu.memory_space<vmem>>, vector<1x256x128xbf16>
    %26 = vector.shape_cast %25 : vector<1x256x128xbf16> to vector<256x128xbf16>
    %cst_14 = arith.constant dense<0.000000e+00> : vector<128x128xf32>
    %27 = tpu.matmul %23, %26, %cst_14 {dimension_numbers = #tpu.dot_dimension_numbers<[1], [0], [0], [1], [0, 0, 1, 1], [], []>} : vector<128x256xbf16>, vector<256x128xbf16>, vector<128x128xf32> -> vector<128x128xf32>
    %28 = arith.addf %24, %27 : vector<128x128xf32>
    %c0_15 = arith.constant 0 : index
    %c0_16 = arith.constant 0 : index
    %29 = vector.load %arg8[%c0_15, %c0_16] : memref<128x128xf32, #tpu.memory_space<vmem>>, vector<128x128xf32>
    tpu.vector_store %arg8[%c0_15, %c0_16], %28 {strides = array<i32>} : memref<128x128xf32, #tpu.memory_space<vmem>>, vector<128x128xf32>,
    %c1_i32 = arith.constant 1 : i32
    %30 = arith.cmpi eq, %arg1, %c1_i32 : i32
    %31 = arith.extui %30 : i1 to i32
    %c0_i32_17 = arith.constant 0 : i32
    %32 = arith.cmpi ne, %31, %c0_i32_17 : i32
    scf.if %32 {
      %c0_18 = arith.constant 0 : index
      %c0_19 = arith.constant 0 : index
      %33 = vector.load %arg2[%c0_18, %c0_19] : memref<128x128xf32, #tpu.memory_space<vmem>>, vector<128x128xf32>
      %c0_20 = arith.constant 0 : index
      %c0_21 = arith.constant 0 : index
      %34 = vector.load %arg8[%c0_20, %c0_21] : memref<128x128xf32, #tpu.memory_space<vmem>>, vector<128x128xf32>
      %35 = arith.addf %33, %34 : vector<128x128xf32>
      %c0_22 = arith.constant 0 : index
      %c0_23 = arith.constant 0 : index
      %36 = vector.load %arg6[%c0_22, %c0_23] : memref<128x128xf32, #tpu.memory_space<vmem>>, vector<128x128xf32>
      tpu.vector_store %arg6[%c0_22, %c0_23], %35 {strides = array<i32>} : memref<128x128xf32, #tpu.memory_space<vmem>>, vector<128x128xf32>,
    } else {
    }
    return
  }
  func.func @transform_0(%arg0: i32, %arg1: i32) -> (i32, i32) {
    %c0_i32 = arith.constant 0 : i32
    %c0_i32_0 = arith.constant 0 : i32
    return %arg0, %c0_i32 : i32, i32
  }
  func.func @transform_1(%arg0: i32, %arg1: i32) -> (i32, i32) {
    %c0_i32 = arith.constant 0 : i32
    %c0_i32_0 = arith.constant 0 : i32
    %c0_i32_1 = arith.constant 0 : i32
    return %c0_i32, %c0_i32_0 : i32, i32
  }
  func.func @transform_2(%arg0: i32, %arg1: i32) -> (i32, i32, i32) {
    %c0_i32 = arith.constant 0 : i32
    %c0_i32_0 = arith.constant 0 : i32
    %c0_i32_1 = arith.constant 0 : i32
    return %arg1, %c0_i32, %c0_i32_0 : i32, i32, i32
  }
  func.func @transform_3(%arg0: i32, %arg1: i32) -> (i32, i32, i32) {
    %c0_i32 = arith.constant 0 : i32
    %c0_i32_0 = arith.constant 0 : i32
    %c0_i32_1 = arith.constant 0 : i32
    return %arg1, %c0_i32, %c0_i32_0 : i32, i32, i32
  }
  func.func @transform_4(%arg0: i32, %arg1: i32) -> (i32, i32) {
    %c0_i32 = arith.constant 0 : i32
    %c0_i32_0 = arith.constant 0 : i32
    return %arg0, %c0_i32 : i32, i32
  }
}

</mosaic_0001>

<llo_original>
// kernel: tpu_custom_call.1
$region0: #{tpu_custom_call.1}
  #allocation0 [shape = 'u32[]', space=smem, size = 0x4, offset = 0x4, fixed_abs, tag = 'smem constant byte address 0x4 - core index']
  #allocation1 [shape = 'u32[144,128]{1,0:T(1,128)}', space=vmem, size = 0x12000, scoped, tag = 'internal scratch']
  #allocation2 [shape = 'bf16[128,128]{1,0:T(16,128)(2,1)}', space=vmem, size = 0x8000, scoped, tag = 'scratch operand']
  #allocation3 [shape = 'f32[128,128]{1,0:T(8,128)}', space=vmem, size = 0x10000, scoped, tag = 'scratch operand']
  %s0 = inlined_call_operand.hbm [shape: f32[256,128], index: 0, kind: input, shape index: {}]
  %s1 = inlined_call_operand.hbm [shape: f32[1,128], index: 1, kind: input, shape index: {}]
  %s2 = inlined_call_operand.hbm [shape: bf16[2,128,512], index: 2, kind: input, shape index: {}]
  %s3 = inlined_call_operand.hbm [shape: bf16[2,256,128], index: 3, kind: input, shape index: {}]
  %s4 = inlined_call_operand.hbm [shape: f32[256,128], index: 4, kind: output, shape index: {}]
  %s5 = sld [smem:[#allocation0]]
  $region73: #{tpu_custom_call.1} parent=0
    _
  %s7 = ssub.s32 1, %s5
  %s8 = scalar_select 0, %s7, %s5
  $region1: #{tpu_custom_call.1} parent=0
    #allocation4 [shape = 'u8[131072]{0}', space=vmem, size = 0x20000, scoped, tag = 'input window, operand 0']
    #allocation5 [shape = 's32[2]{0}', space=sflag, size = 0x8, scoped, tag = 'scoped memory for tpu_custom_call.1']
    #allocation6 [shape = 's32[2]{0}', space=sflag, size = 0x8, scoped, tag = 'scoped memory for tpu_custom_call.1']
    #allocation7 [shape = 'u8[512]{0}', space=vmem, size = 0x400, scoped, tag = 'input window, operand 1, single buffered']
    #allocation8 [shape = 's32[1]{0}', space=sflag, size = 0x4, scoped, tag = 'scoped memory for tpu_custom_call.1']
    #allocation9 [shape = 'u8[262144]{0}', space=vmem, size = 0x40000, scoped, tag = 'input window, operand 2']
    #allocation10 [shape = 'u8[131072]{0}', space=vmem, size = 0x20000, scoped, tag = 'input window, operand 3']
    #allocation11 [shape = 'u8[131072]{0}', space=vmem, size = 0x20000, scoped, tag = 'output window, operand 0']
    %9 = vsyncpa [#allocation5], 0
    %s10 = scalar_lea.sflag [#allocation5], 1
    %11 = vsyncpa %s10, 0
    %12 = vsyncpa [#allocation8], 0
    %13 = vsyncpa [#allocation6], 0
    %s14 = scalar_lea.sflag [#allocation6], 1
    %15 = vsyncpa %s14, 0
    loop: start=0, step=1, limit=6
    $region2: #{tpu_custom_call.1} parent=1 // loop_pre_header
      _
    $region3: #{tpu_custom_call.1} parent=1 // loop_header
      %s17 = sphi 0, %s21
      %p18 = scmp.ge.s32.totalorder %s17, 6
      %s24 = sphi 0, %s36
      %s25 = sphi 0, %s32
      %s26 = sphi 0, %s24
      %s27 = sphi 0, %s25
      %s28 = sphi 0, %s26
      %s29 = sphi 0, %s27
      %s39 = sphi 0, %s41
      %s42 = sphi 0, %s39
      %s43 = sphi 0, %s42
      %s59 = sphi 0, %s43
      %s63 = sphi 0, %s63
      %s65 = sphi 0, %s63
      %s66 = sphi 0, %s65
      %s80 = sphi 0, %s66
      %s86 = sphi 0, %s88
      %s89 = sphi 0, %s86
      %s90 = sphi 0, %s89
      %s106 = sphi 0, %s90
      %s112 = sphi 0, %s114
      %s115 = sphi 0, %s112
      %s116 = sphi 0, %s115
      %s132 = sphi 0, %s116
      %s138 = sphi 0, %s140
      %s141 = sphi 0, %s138
      %s142 = sphi 0, %s141
      %s158 = sphi 0, %s142
    $region4: #{tpu_custom_call.1} parent=1 // loop_header_branch
      %20 = sbr.rel (%p18) target = $region8
    $region5: #{tpu_custom_call.1} parent=1 // loop_body
      %s22 = ssub.s32 %s17, 1
      %s23 = ssub.s32 %s17, 2
      %s30 = sadd.s32 1, %s25
      %p31 = scmp.ge.s32.totalorder %s30, 2
      %s32 = scalar_select %p31, 0, %s30
      %s33 = sadd.s32 1, %s24
      %s34 = scalar_select %p31, %s33, %s24
      %p35 = scmp.ge.s32.totalorder %s34, 2
      %s36 = scalar_select %p35, 0, %s34
      %s37 = ssub.s32 %s24, %s36
      %p38 = scmp.eq.s32.totalorder %s37, 0
      %s40 = sadd.s32 %s39, 1
      %s41 = scalar_select %p38, %s39, %s40
      %p44 = pneg %p38
      %p45 = scmp.eq.s32.totalorder %s17, 3
      %p46 = por %p44, %p45
      %p47 = scmp.ne.s32.totalorder %s39, %s42
      %p48 = scmp.eq.s32.totalorder %s17, 0
      %p49 = por %p47, %p48
      %p50 = scmp.ne.s32.totalorder %s39, %s42
      %p51 = scmp.eq.s32.totalorder %s22, 3
      %p52 = por %p50, %p51
      %p53 = scmp.ne.s32.totalorder %s42, %s43
      %p54 = scmp.eq.s32.totalorder %s22, 0
      %p55 = por %p53, %p54
      %p56 = scmp.ne.s32.totalorder %s42, %s43
      %p57 = scmp.eq.s32.totalorder %s23, 3
      %p58 = por %p56, %p57
      %p60 = scmp.ne.s32.totalorder %s43, %s59
      %p61 = scmp.eq.s32.totalorder %s23, 0
      %p62 = por %p60, %p61
      %s64 = sadd.s32 %s63, 1
      %p67 = scmp.eq.s32.totalorder %s17, 3
      %p68 = scmp.ne.s32.totalorder %s63, %s65
      %p69 = scmp.eq.s32.totalorder %s17, 0
      %p70 = por %p68, %p69
      %p71 = scmp.ne.s32.totalorder %s63, %s65
      %p72 = scmp.eq.s32.totalorder %s22, 3
      %p73 = por %p71, %p72
      %p74 = scmp.ne.s32.totalorder %s65, %s66
      %p75 = scmp.eq.s32.totalorder %s22, 0
      %p76 = por %p74, %p75
      %p77 = scmp.ne.s32.totalorder %s65, %s66
      %p78 = scmp.eq.s32.totalorder %s23, 3
      %p79 = por %p77, %p78
      %p81 = scmp.ne.s32.totalorder %s66, %s80
      %p82 = scmp.eq.s32.totalorder %s23, 0
      %p83 = por %p81, %p82
      %s84 = ssub.s32 %s25, %s32
      %p85 = scmp.eq.s32.totalorder %s84, 0
      %s87 = sadd.s32 %s86, 1
      %s88 = scalar_select %p85, %s86, %s87
      %p91 = pneg %p85
      %p92 = scmp.eq.s32.totalorder %s17, 3
      %p93 = por %p91, %p92
      %p94 = scmp.ne.s32.totalorder %s86, %s89
      %p95 = scmp.eq.s32.totalorder %s17, 0
      %p96 = por %p94, %p95
      %p97 = scmp.ne.s32.totalorder %s86, %s89
      %p98 = scmp.eq.s32.totalorder %s22, 3
      %p99 = por %p97, %p98
      %p100 = scmp.ne.s32.totalorder %s89, %s90
      %p101 = scmp.eq.s32.totalorder %s22, 0
      %p102 = por %p100, %p101
      %p103 = scmp.ne.s32.totalorder %s89, %s90
      %p104 = scmp.eq.s32.totalorder %s23, 3
      %p105 = por %p103, %p104
      %p107 = scmp.ne.s32.totalorder %s90, %s106
      %p108 = scmp.eq.s32.totalorder %s23, 0
      %p109 = por %p107, %p108
      %s110 = ssub.s32 %s25, %s32
      %p111 = scmp.eq.s32.totalorder %s110, 0
      %s113 = sadd.s32 %s112, 1
      %s114 = scalar_select %p111, %s112, %s113
      %p117 = pneg %p111
      %p118 = scmp.eq.s32.totalorder %s17, 3
      %p119 = por %p117, %p118
      %p120 = scmp.ne.s32.totalorder %s112, %s115
      %p121 = scmp.eq.s32.totalorder %s17, 0
      %p122 = por %p120, %p121
      %p123 = scmp.ne.s32.totalorder %s112, %s115
      %p124 = scmp.eq.s32.totalorder %s22, 3
      %p125 = por %p123, %p124
      %p126 = scmp.ne.s32.totalorder %s115, %s116
      %p127 = scmp.eq.s32.totalorder %s22, 0
      %p128 = por %p126, %p127
      %p129 = scmp.ne.s32.totalorder %s115, %s116
      %p130 = scmp.eq.s32.totalorder %s23, 3
      %p131 = por %p129, %p130
      %p133 = scmp.ne.s32.totalorder %s116, %s132
      %p134 = scmp.eq.s32.totalorder %s23, 0
      %p135 = por %p133, %p134
      %s136 = ssub.s32 %s24, %s36
      %p137 = scmp.eq.s32.totalorder %s136, 0
      %s139 = sadd.s32 %s138, 1
      %s140 = scalar_select %p137, %s138, %s139
      %p143 = pneg %p137
      %p144 = scmp.eq.s32.totalorder %s17, 3
      %p145 = por %p143, %p144
      %p146 = scmp.ne.s32.totalorder %s138, %s141
      %p147 = scmp.eq.s32.totalorder %s17, 0
      %p148 = por %p146, %p147
      %p149 = scmp.ne.s32.totalorder %s138, %s141
      %p150 = scmp.eq.s32.totalorder %s22, 3
      %p151 = por %p149, %p150
      %p152 = scmp.ne.s32.totalorder %s141, %s142
      %p153 = scmp.eq.s32.totalorder %s22, 0
      %p154 = por %p152, %p153
      %p155 = scmp.ne.s32.totalorder %s141, %s142
      %p156 = scmp.eq.s32.totalorder %s23, 3
      %p157 = por %p155, %p156
      %p159 = scmp.ne.s32.totalorder %s142, %s158
      %p160 = scmp.eq.s32.totalorder %s23, 0
      %p161 = por %p159, %p160
      %p162 = scmp.le.s32.totalorder 1, %s17
      %p163 = scmp.lt.s32.totalorder %s17, 5
      %p164 = pnand %p162, %p163
      %p165 = pneg %p164
      // Predicated region
      $region9: #{tpu_custom_call.1} parent=5 // pred_check
        _
      $region10: #{tpu_custom_call.1} parent=5 // pred_check_branch
        %167 = sbr.rel (%p164) target = $region12
      $region11: #{tpu_custom_call.1} parent=5 // pred_region
        %s168 = ssub.s32 %s17, 1
        // Predicated region
        $region13: #{tpu_custom_call.1} parent=11 // pred_check
          %p169 = pneg %p76
        $region14: #{tpu_custom_call.1} parent=11 // pred_check_branch
          %171 = sbr.rel (%p169) target = $region16
        $region15: #{tpu_custom_call.1} parent=11 // pred_region
          %s173 = ssub.s32 16, 16
          %174 = vsyncadd [#allocation8], %s173
          %s176 = sshll.u32 [#allocation7], 4
          %s177 = int_to_ptr.vmem [resolvable:$true] %s176
          %179 = dma.hbm_to_vmem [thread:$0]  %s1, 16, %s177, [#allocation8]
        $region16: #{tpu_custom_call.1} parent=11 // pred_fallthru
          _
      $region12: #{tpu_custom_call.1} parent=5 // pred_fallthru
        _
      %p180 = scmp.lt.s32.totalorder %s17, 4
      // Predicated region
      $region17: #{tpu_custom_call.1} parent=5 // pred_check
        %p181 = pneg %p180
      $region18: #{tpu_custom_call.1} parent=5 // pred_check_branch
        %183 = sbr.rel (%p181) target = $region20
      $region19: #{tpu_custom_call.1} parent=5 // pred_region
        // Predicated region
        $region21: #{tpu_custom_call.1} parent=19 // pred_check
          %p184 = pneg %p49
        $region22: #{tpu_custom_call.1} parent=19 // pred_check_branch
          %186 = sbr.rel (%p184) target = $region24
        $region23: #{tpu_custom_call.1} parent=19 // pred_region
          %s187 = sand.u32 %s17, 1
          %s188 = scalar_lea.sflag [#allocation5], %s187
          %s189 = sand.u32 %s39, 1
          %s190 = smul.addr %s189, 128
          %s191 = scalar_lea.vmem [#allocation4], %s190
          %s192 = smul.u32 16, %s24
          %s194 = ssub.s32 2048, 2048
          %195 = vsyncadd %s188, %s194
          %s196 = smul.addr %s192, 128
          %s197 = scalar_lea.hbm %s0, %s196
          %s198 = sshll.u32 %s191, 4
          %s199 = int_to_ptr.vmem [resolvable:$true] %s198
          %204 = dma.hbm_to_vmem [thread:$0]  %s197, 2048, %s199, %s188, 128, 128, 8
        $region24: #{tpu_custom_call.1} parent=19 // pred_fallthru
          _
        // Predicated region
        $region25: #{tpu_custom_call.1} parent=19 // pred_check
          %p205 = pneg %p96
        $region26: #{tpu_custom_call.1} parent=19 // pred_check_branch
          %207 = sbr.rel (%p205) target = $region28
        $region27: #{tpu_custom_call.1} parent=19 // pred_region
          %s208 = sand.u32 %s17, 1
          %s209 = scalar_lea.sflag [#allocation5], %s208
          %s210 = sand.u32 %s86, 1
          %s211 = smul.addr %s210, 256
          %s212 = scalar_lea.vmem [#allocation9], %s211
          %s214 = ssub.s32 4096, 4096
          %215 = vsyncadd %s209, %s214
          %s216 = smul.addr %s25, 64
          %s217 = smul.addr %s216, 64
          %s218 = scalar_lea.hbm %s2, %s217
          %s219 = sshll.u32 %s212, 4
          %s220 = int_to_ptr.vmem [resolvable:$true] %s219
          %225 = dma.hbm_to_vmem [thread:$0]  %s218, 4096, %s220, %s209, 256, 256, 16
        $region28: #{tpu_custom_call.1} parent=19 // pred_fallthru
          _
        // Predicated region
        $region29: #{tpu_custom_call.1} parent=19 // pred_check
          %p226 = pneg %p122
        $region30: #{tpu_custom_call.1} parent=19 // pred_check_branch
          %228 = sbr.rel (%p226) target = $region32
        $region31: #{tpu_custom_call.1} parent=19 // pred_region
          %s229 = sand.u32 %s17, 1
          %s230 = scalar_lea.sflag [#allocation5], %s229
          %s231 = sand.u32 %s112, 1
          %s232 = smul.addr %s231, 128
          %s233 = scalar_lea.vmem [#allocation10], %s232
          %s235 = ssub.s32 2048, 2048
          %236 = vsyncadd %s230, %s235
          %s237 = smul.addr %s25, 32
          %s238 = smul.addr %s237, 64
          %s239 = scalar_lea.hbm %s3, %s238
          %s240 = sshll.u32 %s233, 4
          %s241 = int_to_ptr.vmem [resolvable:$true] %s240
          %246 = dma.hbm_to_vmem [thread:$0]  %s239, 2048, %s241, %s230, 64, 64, 4
        $region32: #{tpu_custom_call.1} parent=19 // pred_fallthru
          _
      $region20: #{tpu_custom_call.1} parent=5 // pred_fallthru
        _
      %p247 = scmp.le.s32.totalorder 1, %s17
      %p248 = scmp.lt.s32.totalorder %s17, 5
      %p249 = pnand %p247, %p248
      %p250 = pneg %p249
      // Predicated region
      $region33: #{tpu_custom_call.1} parent=5 // pred_check
        _
      $region34: #{tpu_custom_call.1} parent=5 // pred_check_branch
        %252 = sbr.rel (%p249) target = $region36
      $region35: #{tpu_custom_call.1} parent=5 // pred_region
        %s253 = ssub.s32 %s17, 1
        %s254 = sand.u32 %s22, 1
        %s255 = scalar_lea.sflag [#allocation5], %s254
        %s256 = sand.u32 %s42, 1
        %s257 = smul.addr %s256, 128
        %s258 = scalar_lea.vmem [#allocation4], %s257
        // Predicated region
        $region37: #{tpu_custom_call.1} parent=35 // pred_check
          %p259 = pneg %p55
        $region38: #{tpu_custom_call.1} parent=35 // pred_check_branch
          %261 = sbr.rel (%p259) target = $region40
        $region39: #{tpu_custom_call.1} parent=35 // pred_region
          %262 = dma.done %s255, 2048
        $region40: #{tpu_custom_call.1} parent=35 // pred_fallthru
          _
        // Predicated region
        $region41: #{tpu_custom_call.1} parent=35 // pred_check
          %p263 = pneg %p76
        $region42: #{tpu_custom_call.1} parent=35 // pred_check_branch
          %265 = sbr.rel (%p263) target = $region44
        $region43: #{tpu_custom_call.1} parent=35 // pred_region
          %266 = dma.done [#allocation8], 16
        $region44: #{tpu_custom_call.1} parent=35 // pred_fallthru
          _
        %s267 = sand.u32 %s22, 1
        %s268 = scalar_lea.sflag [#allocation5], %s267
        %s269 = sand.u32 %s89, 1
        %s270 = smul.addr %s269, 256
        %s271 = scalar_lea.vmem [#allocation9], %s270
        // Predicated region
        $region45: #{tpu_custom_call.1} parent=35 // pred_check
          %p272 = pneg %p102
        $region46: #{tpu_custom_call.1} parent=35 // pred_check_branch
          %274 = sbr.rel (%p272) target = $region48
        $region47: #{tpu_custom_call.1} parent=35 // pred_region
          %275 = dma.done %s268, 4096
        $region48: #{tpu_custom_call.1} parent=35 // pred_fallthru
          _
        %s276 = sand.u32 %s22, 1
        %s277 = scalar_lea.sflag [#allocation5], %s276
        %s278 = sand.u32 %s115, 1
        %s279 = smul.addr %s278, 128
        %s280 = scalar_lea.vmem [#allocation10], %s279
        // Predicated region
        $region49: #{tpu_custom_call.1} parent=35 // pred_check
          %p281 = pneg %p128
        $region50: #{tpu_custom_call.1} parent=35 // pred_check_branch
          %283 = sbr.rel (%p281) target = $region52
        $region51: #{tpu_custom_call.1} parent=35 // pred_region
          %284 = dma.done %s277, 2048
        $region52: #{tpu_custom_call.1} parent=35 // pred_fallthru
          _
        %s285 = sand.u32 %s22, 1
        %s286 = scalar_lea.sflag [#allocation5], %s285
        %s287 = sand.u32 %s42, 1
        %s288 = smul.addr %s287, 128
        %s289 = scalar_lea.vmem [#allocation4], %s288
        %p290 = pneg %p55
        %p291 = pneg %p52
        %p292 = pneg %p76
        %p293 = pneg %p73
        %s294 = sand.u32 %s22, 1
        %s295 = scalar_lea.sflag [#allocation5], %s294
        %s296 = sand.u32 %s89, 1
        %s297 = smul.addr %s296, 256
        %s298 = scalar_lea.vmem [#allocation9], %s297
        %p299 = pneg %p102
        %p300 = pneg %p99
        %s301 = sand.u32 %s22, 1
        %s302 = scalar_lea.sflag [#allocation5], %s301
        %s303 = sand.u32 %s115, 1
        %s304 = smul.addr %s303, 128
        %s305 = scalar_lea.vmem [#allocation10], %s304
        %p306 = pneg %p128
        %p307 = pneg %p125
        %p308 = pneg %p154
        %p309 = pneg %p151
        %s310 = sand.u32 %s141, 1
        %s311 = scalar_lea.sflag [#allocation6], %s310
        %s312 = sand.u32 %s141, 1
        %s313 = smul.addr %s312, 128
        %s314 = scalar_lea.vmem [#allocation11], %s313
        %s315 = smul.u32 16, %s26
        %s316 = smul.u32 16, %s26
        %p318 = scmp.eq.s32.totalorder %s27, 0
        // Predicated region
        $region53: #{tpu_custom_call.1} parent=35 // pred_check
          %p319 = pneg %p318
        $region54: #{tpu_custom_call.1} parent=35 // pred_check_branch
          %321 = sbr.rel (%p319) target = $region56
        $region55: #{tpu_custom_call.1} parent=35 // pred_region
          %v322 = vld [vmem:[%s258] sm:$0xff]
          %v323 = vld [vmem:[%s258 + $0x8] sm:$0xff]
          %v324 = vld [vmem:[%s258 + $0x10] sm:$0xff]
          %v325 = vld [vmem:[%s258 + $0x18] sm:$0xff]
          %v326 = vld [vmem:[%s258 + $0x20] sm:$0xff]
          %v327 = vld [vmem:[%s258 + $0x28] sm:$0xff]
          %v328 = vld [vmem:[%s258 + $0x30] sm:$0xff]
          %v329 = vld [vmem:[%s258 + $0x38] sm:$0xff]
          %v330 = vld [vmem:[%s258 + $0x40] sm:$0xff]
          %v331 = vld [vmem:[%s258 + $0x48] sm:$0xff]
          %v332 = vld [vmem:[%s258 + $0x50] sm:$0xff]
          %v333 = vld [vmem:[%s258 + $0x58] sm:$0xff]
          %v334 = vld [vmem:[%s258 + $0x60] sm:$0xff]
          %v335 = vld [vmem:[%s258 + $0x68] sm:$0xff]
          %v336 = vld [vmem:[%s258 + $0x70] sm:$0xff]
          %v337 = vld [vmem:[%s258 + $0x78] sm:$0xff]
          %v338 = vmul.f32 %v322, %v322
          %v339 = vmul.f32 %v323, %v323
          %v340 = vmul.f32 %v324, %v324
          %v341 = vmul.f32 %v325, %v325
          %v342 = vmul.f32 %v326, %v326
          %v343 = vmul.f32 %v327, %v327
          %v344 = vmul.f32 %v328, %v328
          %v345 = vmul.f32 %v329, %v329
          %v346 = vmul.f32 %v330, %v330
          %v347 = vmul.f32 %v331, %v331
          %v348 = vmul.f32 %v332, %v332
          %v349 = vmul.f32 %v333, %v333
          %v350 = vmul.f32 %v334, %v334
          %v351 = vmul.f32 %v335, %v335
          %v352 = vmul.f32 %v336, %v336
          %v353 = vmul.f32 %v337, %v337
          %354 = vadd.xlane.f32.xlu0 %v338
          %v355 = vpop.xlane.xlu0 %354
          %356 = vadd.xlane.f32.xlu0 %v339
          %v357 = vpop.xlane.xlu0 %356
          %358 = vadd.xlane.f32.xlu0 %v340
          %v359 = vpop.xlane.xlu0 %358
          %360 = vadd.xlane.f32.xlu0 %v341
          %v361 = vpop.xlane.xlu0 %360
          %362 = vadd.xlane.f32.xlu0 %v342
          %v363 = vpop.xlane.xlu0 %362
          %364 = vadd.xlane.f32.xlu0 %v343
          %v365 = vpop.xlane.xlu0 %364
          %366 = vadd.xlane.f32.xlu0 %v344
          %v367 = vpop.xlane.xlu0 %366
          %368 = vadd.xlane.f32.xlu0 %v345
          %v369 = vpop.xlane.xlu0 %368
          %370 = vadd.xlane.f32.xlu0 %v346
          %v371 = vpop.xlane.xlu0 %370
          %372 = vadd.xlane.f32.xlu0 %v347
          %v373 = vpop.xlane.xlu0 %372
          %374 = vadd.xlane.f32.xlu0 %v348
          %v375 = vpop.xlane.xlu0 %374
          %376 = vadd.xlane.f32.xlu0 %v349
          %v377 = vpop.xlane.xlu0 %376
          %378 = vadd.xlane.f32.xlu0 %v350
          %v379 = vpop.xlane.xlu0 %378
          %380 = vadd.xlane.f32.xlu0 %v351
          %v381 = vpop.xlane.xlu0 %380
          %382 = vadd.xlane.f32.xlu0 %v352
          %v383 = vpop.xlane.xlu0 %382
          %384 = vadd.xlane.f32.xlu0 %v353
          %v385 = vpop.xlane.xlu0 %384
          %v386 = vrcp.pop 128.0
          %v387 = vmul.f32 %v355, %v386
          %v388 = vmul.f32 %v357, %v386
          %v389 = vmul.f32 %v359, %v386
          %v390 = vmul.f32 %v361, %v386
          %v391 = vmul.f32 %v363, %v386
          %v392 = vmul.f32 %v365, %v386
          %v393 = vmul.f32 %v367, %v386
          %v394 = vmul.f32 %v369, %v386
          %v395 = vmul.f32 %v371, %v386
          %v396 = vmul.f32 %v373, %v386
          %v397 = vmul.f32 %v375, %v386
          %v398 = vmul.f32 %v377, %v386
          %v399 = vmul.f32 %v379, %v386
          %v400 = vmul.f32 %v381, %v386
          %v401 = vmul.f32 %v383, %v386
          %v402 = vmul.f32 %v385, %v386
          %v403 = vld [vmem:[#allocation7] sm:$0x1]
          %v404 = vadd.f32 %v387, 1e-06
          %v405 = vadd.f32 %v388, 1e-06
          %v406 = vadd.f32 %v389, 1e-06
          %v407 = vadd.f32 %v390, 1e-06
          %v408 = vadd.f32 %v391, 1e-06
          %v409 = vadd.f32 %v392, 1e-06
          %v410 = vadd.f32 %v393, 1e-06
          %v411 = vadd.f32 %v394, 1e-06
          %v412 = vadd.f32 %v395, 1e-06
          %v413 = vadd.f32 %v396, 1e-06
          %v414 = vadd.f32 %v397, 1e-06
          %v415 = vadd.f32 %v398, 1e-06
          %v416 = vadd.f32 %v399, 1e-06
          %v417 = vadd.f32 %v400, 1e-06
          %v418 = vadd.f32 %v401, 1e-06
          %v419 = vadd.f32 %v402, 1e-06
          %v420 = vrsqrt.pop %v404
          %v421 = vrsqrt.pop %v405
          %v422 = vrsqrt.pop %v406
          %v423 = vrsqrt.pop %v407
          %v424 = vrsqrt.pop %v408
          %v425 = vrsqrt.pop %v409
          %v426 = vrsqrt.pop %v410
          %v427 = vrsqrt.pop %v411
          %v428 = vrsqrt.pop %v412
          %v429 = vrsqrt.pop %v413
          %v430 = vrsqrt.pop %v414
          %v431 = vrsqrt.pop %v415
          %v432 = vrsqrt.pop %v416
          %v433 = vrsqrt.pop %v417
          %v434 = vrsqrt.pop %v418
          %v435 = vrsqrt.pop %v419
          %v436 = vmul.f32 %v322, %v420
          %v437 = vmul.f32 %v323, %v421
          %v438 = vmul.f32 %v324, %v422
          %v439 = vmul.f32 %v325, %v423
          %v440 = vmul.f32 %v326, %v424
          %v441 = vmul.f32 %v327, %v425
          %v442 = vmul.f32 %v328, %v426
          %v443 = vmul.f32 %v329, %v427
          %v444 = vmul.f32 %v330, %v428
          %v445 = vmul.f32 %v331, %v429
          %v446 = vmul.f32 %v332, %v430
          %v447 = vmul.f32 %v333, %v431
          %v448 = vmul.f32 %v334, %v432
          %v449 = vmul.f32 %v335, %v433
          %v450 = vmul.f32 %v336, %v434
          %v451 = vmul.f32 %v337, %v435
          %v453 = vlaneseq
          %v454 = vshrl.u32 %v453, 7
          %v455 = vsub.s32 0, %v454
          %v456 = vrot.slane %v403, %v455
          %v458 = vmul.f32 %v456, %v436
          %v459 = vmul.f32 %v456, %v437
          %v460 = vmul.f32 %v456, %v438
          %v461 = vmul.f32 %v456, %v439
          %v462 = vmul.f32 %v456, %v440
          %v463 = vmul.f32 %v456, %v441
          %v464 = vmul.f32 %v456, %v442
          %v465 = vmul.f32 %v456, %v443
          %v466 = vmul.f32 %v456, %v444
          %v467 = vmul.f32 %v456, %v445
          %v468 = vmul.f32 %v456, %v446
          %v469 = vmul.f32 %v456, %v447
          %v470 = vmul.f32 %v456, %v448
          %v471 = vmul.f32 %v456, %v449
          %v472 = vmul.f32 %v456, %v450
          %v473 = vmul.f32 %v456, %v451
          %v474 = vpack.c.bf16 %v459, %v458
          %v475 = vpack.c.bf16 %v461, %v460
          %v476 = vpack.c.bf16 %v463, %v462
          %v477 = vpack.c.bf16 %v465, %v464
          %v478 = vpack.c.bf16 %v467, %v466
          %v479 = vpack.c.bf16 %v469, %v468
          %v480 = vpack.c.bf16 %v471, %v470
          %v481 = vpack.c.bf16 %v473, %v472
          %482 = vst [vmem:[#allocation2] sm:$0xff] %v474
          %483 = vst [vmem:[#allocation2 + $0x8] sm:$0xff] %v475
          %484 = vst [vmem:[#allocation2 + $0x10] sm:$0xff] %v476
          %485 = vst [vmem:[#allocation2 + $0x18] sm:$0xff] %v477
          %486 = vst [vmem:[#allocation2 + $0x20] sm:$0xff] %v478
          %487 = vst [vmem:[#allocation2 + $0x28] sm:$0xff] %v479
          %488 = vst [vmem:[#allocation2 + $0x30] sm:$0xff] %v480
          %489 = vst [vmem:[#allocation2 + $0x38] sm:$0xff] %v481
          %490 = vst [vmem:[#allocation3] sm:$0xff] 0.0
          %491 = vst [vmem:[#allocation3 + $0x8] sm:$0xff] 0.0
          %492 = vst [vmem:[#allocation3 + $0x10] sm:$0xff] 0.0
          %493 = vst [vmem:[#allocation3 + $0x18] sm:$0xff] 0.0
          %494 = vst [vmem:[#allocation3 + $0x20] sm:$0xff] 0.0
          %495 = vst [vmem:[#allocation3 + $0x28] sm:$0xff] 0.0
          %496 = vst [vmem:[#allocation3 + $0x30] sm:$0xff] 0.0
          %497 = vst [vmem:[#allocation3 + $0x38] sm:$0xff] 0.0
          %498 = vst [vmem:[#allocation3 + $0x40] sm:$0xff] 0.0
          %499 = vst [vmem:[#allocation3 + $0x48] sm:$0xff] 0.0
          %500 = vst [vmem:[#allocation3 + $0x50] sm:$0xff] 0.0
          %501 = vst [vmem:[#allocation3 + $0x58] sm:$0xff] 0.0
          %502 = vst [vmem:[#allocation3 + $0x60] sm:$0xff] 0.0
          %503 = vst [vmem:[#allocation3 + $0x68] sm:$0xff] 0.0
          %504 = vst [vmem:[#allocation3 + $0x70] sm:$0xff] 0.0
          %505 = vst [vmem:[#allocation3 + $0x78] sm:$0xff] 0.0
        $region56: #{tpu_custom_call.1} parent=35 // pred_fallthru
          _
        %v506 = vld [vmem:[#allocation2] sm:$0xff]
        %v507 = vld [vmem:[#allocation2 + $0x8] sm:$0xff]
        %v508 = vld [vmem:[#allocation2 + $0x10] sm:$0xff]
        %v509 = vld [vmem:[#allocation2 + $0x18] sm:$0xff]
        %v510 = vld [vmem:[#allocation2 + $0x20] sm:$0xff]
        %v511 = vld [vmem:[#allocation2 + $0x28] sm:$0xff]
        %v512 = vld [vmem:[#allocation2 + $0x30] sm:$0xff]
        %v513 = vld [vmem:[#allocation2 + $0x38] sm:$0xff]
        %v514 = vld [vmem:[%s271] sm:$0xff]
        %v515 = vld [vmem:[%s271 + $0x8] sm:$0xff]
        %v516 = vld [vmem:[%s271 + $0x10] sm:$0xff]
        %v517 = vld [vmem:[%s271 + $0x18] sm:$0xff]
        %v518 = vld [vmem:[%s271 + $0x20] sm:$0xff]
        %v519 = vld [vmem:[%s271 + $0x28] sm:$0xff]
        %v520 = vld [vmem:[%s271 + $0x30] sm:$0xff]
        %v521 = vld [vmem:[%s271 + $0x38] sm:$0xff]
        %v522 = vld [vmem:[%s271 + $0x40] sm:$0xff]
        %v523 = vld [vmem:[%s271 + $0x48] sm:$0xff]
        %v524 = vld [vmem:[%s271 + $0x50] sm:$0xff]
        %v525 = vld [vmem:[%s271 + $0x58] sm:$0xff]
        %v526 = vld [vmem:[%s271 + $0x60] sm:$0xff]
        %v527 = vld [vmem:[%s271 + $0x68] sm:$0xff]
        %v528 = vld [vmem:[%s271 + $0x70] sm:$0xff]
        %v529 = vld [vmem:[%s271 + $0x78] sm:$0xff]
        %v530 = vld [vmem:[%s271 + $0x80] sm:$0xff]
        %v531 = vld [vmem:[%s271 + $0x88] sm:$0xff]
        %v532 = vld [vmem:[%s271 + $0x90] sm:$0xff]
        %v533 = vld [vmem:[%s271 + $0x98] sm:$0xff]
        %v534 = vld [vmem:[%s271 + $0xa0] sm:$0xff]
        %v535 = vld [vmem:[%s271 + $0xa8] sm:$0xff]
        %v536 = vld [vmem:[%s271 + $0xb0] sm:$0xff]
        %v537 = vld [vmem:[%s271 + $0xb8] sm:$0xff]
        %v538 = vld [vmem:[%s271 + $0xc0] sm:$0xff]
        %v539 = vld [vmem:[%s271 + $0xc8] sm:$0xff]
        %v540 = vld [vmem:[%s271 + $0xd0] sm:$0xff]
        %v541 = vld [vmem:[%s271 + $0xd8] sm:$0xff]
        %v542 = vld [vmem:[%s271 + $0xe0] sm:$0xff]
        %v543 = vld [vmem:[%s271 + $0xe8] sm:$0xff]
        %v544 = vld [vmem:[%s271 + $0xf0] sm:$0xff]
        %v545 = vld [vmem:[%s271 + $0xf8] sm:$0xff]
        %v578 = vunpack.c.l.b16 %v514
        %v579 = vunpack.c.h.b16 %v514
        %v580 = vunpack.c.l.b16 %v515
        %v581 = vunpack.c.h.b16 %v515
        %v582 = vunpack.c.l.b16 %v516
        %v583 = vunpack.c.h.b16 %v516
        %v584 = vunpack.c.l.b16 %v517
        %v585 = vunpack.c.h.b16 %v517
        %v586 = vunpack.c.l.b16 %v518
        %v587 = vunpack.c.h.b16 %v518
        %v588 = vunpack.c.l.b16 %v519
        %v589 = vunpack.c.h.b16 %v519
        %v590 = vunpack.c.l.b16 %v520
        %v591 = vunpack.c.h.b16 %v520
        %v592 = vunpack.c.l.b16 %v521
        %v593 = vunpack.c.h.b16 %v521
        %v594 = vunpack.c.l.b16 %v522
        %v595 = vunpack.c.h.b16 %v522
        %v596 = vunpack.c.l.b16 %v523
        %v597 = vunpack.c.h.b16 %v523
        %v598 = vunpack.c.l.b16 %v524
        %v599 = vunpack.c.h.b16 %v524
        %v600 = vunpack.c.l.b16 %v525
        %v601 = vunpack.c.h.b16 %v525
        %v602 = vunpack.c.l.b16 %v526
        %v603 = vunpack.c.h.b16 %v526
        %v604 = vunpack.c.l.b16 %v527
        %v605 = vunpack.c.h.b16 %v527
        %v606 = vunpack.c.l.b16 %v528
        %v607 = vunpack.c.h.b16 %v528
        %v608 = vunpack.c.l.b16 %v529
        %v609 = vunpack.c.h.b16 %v529
        %v610 = vunpack.c.l.b16 %v530
        %v611 = vunpack.c.h.b16 %v530
        %v612 = vunpack.c.l.b16 %v531
        %v613 = vunpack.c.h.b16 %v531
        %v614 = vunpack.c.l.b16 %v532
        %v615 = vunpack.c.h.b16 %v532
        %v616 = vunpack.c.l.b16 %v533
        %v617 = vunpack.c.h.b16 %v533
        %v618 = vunpack.c.l.b16 %v534
        %v619 = vunpack.c.h.b16 %v534
        %v620 = vunpack.c.l.b16 %v535
        %v621 = vunpack.c.h.b16 %v535
        %v622 = vunpack.c.l.b16 %v536
        %v623 = vunpack.c.h.b16 %v536
        %v624 = vunpack.c.l.b16 %v537
        %v625 = vunpack.c.h.b16 %v537
        %v626 = vunpack.c.l.b16 %v538
        %v627 = vunpack.c.h.b16 %v538
        %v628 = vunpack.c.l.b16 %v539
        %v629 = vunpack.c.h.b16 %v539
        %v630 = vunpack.c.l.b16 %v540
        %v631 = vunpack.c.h.b16 %v540
        %v632 = vunpack.c.l.b16 %v541
        %v633 = vunpack.c.h.b16 %v541
        %v634 = vunpack.c.l.b16 %v542
        %v635 = vunpack.c.h.b16 %v542
        %v636 = vunpack.c.l.b16 %v543
        %v637 = vunpack.c.h.b16 %v543
        %v638 = vunpack.c.l.b16 %v544
        %v639 = vunpack.c.h.b16 %v544
        %v640 = vunpack.c.l.b16 %v545
        %v641 = vunpack.c.h.b16 %v545
        %v642 = vpack.c.b16 %v582, %v578
        %v643 = vpack.c.b16 %v583, %v579
        %v644 = vpack.c.b16 %v584, %v580
        %v645 = vpack.c.b16 %v585, %v581
        %v646 = vpack.c.b16 %v590, %v586
        %v647 = vpack.c.b16 %v591, %v587
        %v648 = vpack.c.b16 %v592, %v588
        %v649 = vpack.c.b16 %v593, %v589
        %v650 = vpack.c.b16 %v598, %v594
        %v651 = vpack.c.b16 %v599, %v595
        %v652 = vpack.c.b16 %v600, %v596
        %v653 = vpack.c.b16 %v601, %v597
        %v654 = vpack.c.b16 %v606, %v602
        %v655 = vpack.c.b16 %v607, %v603
        %v656 = vpack.c.b16 %v608, %v604
        %v657 = vpack.c.b16 %v609, %v605
        %v658 = vpack.c.b16 %v614, %v610
        %v659 = vpack.c.b16 %v615, %v611
        %v660 = vpack.c.b16 %v616, %v612
        %v661 = vpack.c.b16 %v617, %v613
        %v662 = vpack.c.b16 %v622, %v618
        %v663 = vpack.c.b16 %v623, %v619
        %v664 = vpack.c.b16 %v624, %v620
        %v665 = vpack.c.b16 %v625, %v621
        %v666 = vpack.c.b16 %v630, %v626
        %v667 = vpack.c.b16 %v631, %v627
        %v668 = vpack.c.b16 %v632, %v628
        %v669 = vpack.c.b16 %v633, %v629
        %v670 = vpack.c.b16 %v638, %v634
        %v671 = vpack.c.b16 %v639, %v635
        %v672 = vpack.c.b16 %v640, %v636
        %v673 = vpack.c.b16 %v641, %v637
        %706 = vmatprep.subr.bf16.mxu0 %v643
        %707 = vmatpush1.bf16.msra.mxu0 %v642
        %708 = vmatprep.subr.bf16.mxu0 %v647
        %709 = vmatpush1.bf16.msra.mxu0 %v646
        %710 = vmatprep.subr.bf16.mxu0 %v651
        %711 = vmatpush1.bf16.msra.mxu0 %v650
        %712 = vmatprep.subr.bf16.mxu0 %v655
        %713 = vmatpush1.bf16.msra.mxu0 %v654
        %714 = vmatprep.subr.bf16.mxu0 %v659
        %715 = vmatpush1.bf16.msra.mxu0 %v658
        %716 = vmatprep.subr.bf16.mxu0 %v663
        %717 = vmatpush1.bf16.msra.mxu0 %v662
        %718 = vmatprep.subr.bf16.mxu0 %v667
        %719 = vmatpush1.bf16.msra.mxu0 %v666
        %720 = vmatprep.subr.bf16.mxu0 %v671
        %721 = vmatpush1.bf16.msra.mxu0 %v670
        %722 = vmatprep.subr.bf16.mxu0 0
        %723 = vmatpush1.bf16.msra.mxu0 0
        %724 = vmatprep.subr.bf16.mxu0 0
        %725 = vmatpush1.bf16.msra.mxu0 0
        %726 = vmatprep.subr.bf16.mxu0 0
        %727 = vmatpush1.bf16.msra.mxu0 0
        %728 = vmatprep.subr.bf16.mxu0 0
        %729 = vmatpush1.bf16.msra.mxu0 0
        %730 = vmatprep.subr.bf16.mxu0 0
        %731 = vmatpush1.bf16.msra.mxu0 0
        %732 = vmatprep.subr.bf16.mxu0 0
        %733 = vmatpush1.bf16.msra.mxu0 0
        %734 = vmatprep.subr.bf16.mxu0 0
        %735 = vmatpush1.bf16.msra.mxu0 0
        %736 = vmatprep.subr.bf16.mxu0 0
        %737 = vmatpush1.bf16.msra.mxu0 0
        %738 = vmatprep.mubr.bf16.mxu0 0
        %739 = vmatmul.mubr.bf16.gmra.mrb[0].mxu0 %v506
        %v740 = vpop.f32.mrb[0].mxu0
        %v741 = vadd.f32 0.0, %v740
        %v742 = vpop.f32.mrb[0].mxu0
        %v743 = vadd.f32 0.0, %v742
        %v744 = vpop.f32.mrb[0].mxu0
        %v745 = vadd.f32 0.0, %v744
        %v746 = vpop.f32.mrb[0].mxu0
        %v747 = vadd.f32 0.0, %v746
        %748 = vmatprep.mubr.bf16.mxu0 0
        %749 = vmatmul.mubr.bf16.gmra.mrb[0].mxu0 %v507
        %v750 = vpop.f32.mrb[0].mxu0
        %v751 = vadd.f32 0.0, %v750
        %v752 = vpop.f32.mrb[0].mxu0
        %v753 = vadd.f32 0.0, %v752
        %v754 = vpop.f32.mrb[0].mxu0
        %v755 = vadd.f32 0.0, %v754
        %v756 = vpop.f32.mrb[0].mxu0
        %v757 = vadd.f32 0.0, %v756
        %758 = vmatprep.mubr.bf16.mxu0 0
        %759 = vmatmul.mubr.bf16.gmra.mrb[0].mxu0 %v508
        %v760 = vpop.f32.mrb[0].mxu0
        %v761 = vadd.f32 0.0, %v760
        %v762 = vpop.f32.mrb[0].mxu0
        %v763 = vadd.f32 0.0, %v762
        %v764 = vpop.f32.mrb[0].mxu0
        %v765 = vadd.f32 0.0, %v764
        %v766 = vpop.f32.mrb[0].mxu0
        %v767 = vadd.f32 0.0, %v766
        %768 = vmatprep.mubr.bf16.mxu0 0
        %769 = vmatmul.mubr.bf16.gmra.mrb[0].mxu0 %v509
        %v770 = vpop.f32.mrb[0].mxu0
        %v771 = vadd.f32 0.0, %v770
        %v772 = vpop.f32.mrb[0].mxu0
        %v773 = vadd.f32 0.0, %v772
        %v774 = vpop.f32.mrb[0].mxu0
        %v775 = vadd.f32 0.0, %v774
        %v776 = vpop.f32.mrb[0].mxu0
        %v777 = vadd.f32 0.0, %v776
        %778 = vmatprep.mubr.bf16.mxu0 0
        %779 = vmatmul.mubr.bf16.gmra.mrb[0].mxu0 %v510
        %v780 = vpop.f32.mrb[0].mxu0
        %v781 = vadd.f32 0.0, %v780
        %v782 = vpop.f32.mrb[0].mxu0
        %v783 = vadd.f32 0.0, %v782
        %v784 = vpop.f32.mrb[0].mxu0
        %v785 = vadd.f32 0.0, %v784
        %v786 = vpop.f32.mrb[0].mxu0
        %v787 = vadd.f32 0.0, %v786
        %788 = vmatprep.mubr.bf16.mxu0 0
        %789 = vmatmul.mubr.bf16.gmra.mrb[0].mxu0 %v511
        %v790 = vpop.f32.mrb[0].mxu0
        %v791 = vadd.f32 0.0, %v790
        %v792 = vpop.f32.mrb[0].mxu0
        %v793 = vadd.f32 0.0, %v792
        %v794 = vpop.f32.mrb[0].mxu0
        %v795 = vadd.f32 0.0, %v794
        %v796 = vpop.f32.mrb[0].mxu0
        %v797 = vadd.f32 0.0, %v796
        %798 = vmatprep.mubr.bf16.mxu0 0
        %799 = vmatmul.mubr.bf16.gmra.mrb[0].mxu0 %v512
        %v800 = vpop.f32.mrb[0].mxu0
        %v801 = vadd.f32 0.0, %v800
        %v802 = vpop.f32.mrb[0].mxu0
        %v803 = vadd.f32 0.0, %v802
        %v804 = vpop.f32.mrb[0].mxu0
        %v805 = vadd.f32 0.0, %v804
        %v806 = vpop.f32.mrb[0].mxu0
        %v807 = vadd.f32 0.0, %v806
        %808 = vmatprep.mubr.bf16.mxu0 0
        %809 = vmatmul.mubr.bf16.gmra.mrb[0].mxu0 %v513
        %v810 = vpop.f32.mrb[0].mxu0
        %v811 = vadd.f32 0.0, %v810
        %v812 = vpop.f32.mrb[0].mxu0
        %v813 = vadd.f32 0.0, %v812
        %v814 = vpop.f32.mrb[0].mxu0
        %v815 = vadd.f32 0.0, %v814
        %v816 = vpop.f32.mrb[0].mxu0
        %v817 = vadd.f32 0.0, %v816
        %818 = vdwg.mxu0
        %819 = vmatprep.subr.bf16.mxu0 %v645
        %820 = vmatpush1.bf16.msra.mxu0 %v644
        %821 = vmatprep.subr.bf16.mxu0 %v649
        %822 = vmatpush1.bf16.msra.mxu0 %v648
        %823 = vmatprep.subr.bf16.mxu0 %v653
        %824 = vmatpush1.bf16.msra.mxu0 %v652
        %825 = vmatprep.subr.bf16.mxu0 %v657
        %826 = vmatpush1.bf16.msra.mxu0 %v656
        %827 = vmatprep.subr.bf16.mxu0 %v661
        %828 = vmatpush1.bf16.msra.mxu0 %v660
        %829 = vmatprep.subr.bf16.mxu0 %v665
        %830 = vmatpush1.bf16.msra.mxu0 %v664
        %831 = vmatprep.subr.bf16.mxu0 %v669
        %832 = vmatpush1.bf16.msra.mxu0 %v668
        %833 = vmatprep.subr.bf16.mxu0 %v673
        %834 = vmatpush1.bf16.msra.mxu0 %v672
        %835 = vmatprep.subr.bf16.mxu0 0
        %836 = vmatpush1.bf16.msra.mxu0 0
        %837 = vmatprep.subr.bf16.mxu0 0
        %838 = vmatpush1.bf16.msra.mxu0 0
        %839 = vmatprep.subr.bf16.mxu0 0
        %840 = vmatpush1.bf16.msra.mxu0 0
        %841 = vmatprep.subr.bf16.mxu0 0
        %842 = vmatpush1.bf16.msra.mxu0 0
        %843 = vmatprep.subr.bf16.mxu0 0
        %844 = vmatpush1.bf16.msra.mxu0 0
        %845 = vmatprep.subr.bf16.mxu0 0
        %846 = vmatpush1.bf16.msra.mxu0 0
        %847 = vmatprep.subr.bf16.mxu0 0
        %848 = vmatpush1.bf16.msra.mxu0 0
        %849 = vmatprep.subr.bf16.mxu0 0
        %850 = vmatpush1.bf16.msra.mxu0 0
        %851 = vmatprep.mubr.bf16.mxu0 0
        %852 = vmatmul.mubr.bf16.gmra.mrb[0].mxu0 %v506
        %v853 = vpop.f32.mrb[0].mxu0
        %v854 = vadd.f32 0.0, %v853
        %v855 = vpop.f32.mrb[0].mxu0
        %v856 = vadd.f32 0.0, %v855
        %v857 = vpop.f32.mrb[0].mxu0
        %v858 = vadd.f32 0.0, %v857
        %v859 = vpop.f32.mrb[0].mxu0
        %v860 = vadd.f32 0.0, %v859
        %861 = vmatprep.mubr.bf16.mxu0 0
        %862 = vmatmul.mubr.bf16.gmra.mrb[0].mxu0 %v507
        %v863 = vpop.f32.mrb[0].mxu0
        %v864 = vadd.f32 0.0, %v863
        %v865 = vpop.f32.mrb[0].mxu0
        %v866 = vadd.f32 0.0, %v865
        %v867 = vpop.f32.mrb[0].mxu0
        %v868 = vadd.f32 0.0, %v867
        %v869 = vpop.f32.mrb[0].mxu0
        %v870 = vadd.f32 0.0, %v869
        %871 = vmatprep.mubr.bf16.mxu0 0
        %872 = vmatmul.mubr.bf16.gmra.mrb[0].mxu0 %v508
        %v873 = vpop.f32.mrb[0].mxu0
        %v874 = vadd.f32 0.0, %v873
        %v875 = vpop.f32.mrb[0].mxu0
        %v876 = vadd.f32 0.0, %v875
        %v877 = vpop.f32.mrb[0].mxu0
        %v878 = vadd.f32 0.0, %v877
        %v879 = vpop.f32.mrb[0].mxu0
        %v880 = vadd.f32 0.0, %v879
        %881 = vmatprep.mubr.bf16.mxu0 0
        %882 = vmatmul.mubr.bf16.gmra.mrb[0].mxu0 %v509
        %v883 = vpop.f32.mrb[0].mxu0
        %v884 = vadd.f32 0.0, %v883
        %v885 = vpop.f32.mrb[0].mxu0
        %v886 = vadd.f32 0.0, %v885
        %v887 = vpop.f32.mrb[0].mxu0
        %v888 = vadd.f32 0.0, %v887
        %v889 = vpop.f32.mrb[0].mxu0
        %v890 = vadd.f32 0.0, %v889
        %891 = vmatprep.mubr.bf16.mxu0 0
        %892 = vmatmul.mubr.bf16.gmra.mrb[0].mxu0 %v510
        %v893 = vpop.f32.mrb[0].mxu0
        %v894 = vadd.f32 0.0, %v893
        %v895 = vpop.f32.mrb[0].mxu0
        %v896 = vadd.f32 0.0, %v895
        %v897 = vpop.f32.mrb[0].mxu0
        %v898 = vadd.f32 0.0, %v897
        %v899 = vpop.f32.mrb[0].mxu0
        %v900 = vadd.f32 0.0, %v899
        %901 = vmatprep.mubr.bf16.mxu0 0
        %902 = vmatmul.mubr.bf16.gmra.mrb[0].mxu0 %v511
        %v903 = vpop.f32.mrb[0].mxu0
        %v904 = vadd.f32 0.0, %v903
        %v905 = vpop.f32.mrb[0].mxu0
        %v906 = vadd.f32 0.0, %v905
        %v907 = vpop.f32.mrb[0].mxu0
        %v908 = vadd.f32 0.0, %v907
        %v909 = vpop.f32.mrb[0].mxu0
        %v910 = vadd.f32 0.0, %v909
        %911 = vmatprep.mubr.bf16.mxu0 0
        %912 = vmatmul.mubr.bf16.gmra.mrb[0].mxu0 %v512
        %v913 = vpop.f32.mrb[0].mxu0
        %v914 = vadd.f32 0.0, %v913
        %v915 = vpop.f32.mrb[0].mxu0
        %v916 = vadd.f32 0.0, %v915
        %v917 = vpop.f32.mrb[0].mxu0
        %v918 = vadd.f32 0.0, %v917
        %v919 = vpop.f32.mrb[0].mxu0
        %v920 = vadd.f32 0.0, %v919
        %921 = vmatprep.mubr.bf16.mxu0 0
        %922 = vmatmul.mubr.bf16.gmra.mrb[0].mxu0 %v513
        %v923 = vpop.f32.mrb[0].mxu0
        %v924 = vadd.f32 0.0, %v923
        %v925 = vpop.f32.mrb[0].mxu0
        %v926 = vadd.f32 0.0, %v925
        %v927 = vpop.f32.mrb[0].mxu0
        %v928 = vadd.f32 0.0, %v927
        %v929 = vpop.f32.mrb[0].mxu0
        %v930 = vadd.f32 0.0, %v929
        %931 = vdwg.mxu0
        %v932 = vmul.f32 %v741, 0.5
        %v933 = vmul.f32 %v743, 0.5
        %v934 = vmul.f32 %v745, 0.5
        %v935 = vmul.f32 %v747, 0.5
        %v936 = vmul.f32 %v751, 0.5
        %v937 = vmul.f32 %v753, 0.5
        %v938 = vmul.f32 %v755, 0.5
        %v939 = vmul.f32 %v757, 0.5
        %v940 = vmul.f32 %v761, 0.5
        %v941 = vmul.f32 %v763, 0.5
        %v942 = vmul.f32 %v765, 0.5
        %v943 = vmul.f32 %v767, 0.5
        %v944 = vmul.f32 %v771, 0.5
        %v945 = vmul.f32 %v773, 0.5
        %v946 = vmul.f32 %v775, 0.5
        %v947 = vmul.f32 %v777, 0.5
        %v948 = vmul.f32 %v781, 0.5
        %v949 = vmul.f32 %v783, 0.5
        %v950 = vmul.f32 %v785, 0.5
        %v951 = vmul.f32 %v787, 0.5
        %v952 = vmul.f32 %v791, 0.5
        %v953 = vmul.f32 %v793, 0.5
        %v954 = vmul.f32 %v795, 0.5
        %v955 = vmul.f32 %v797, 0.5
        %v956 = vmul.f32 %v801, 0.5
        %v957 = vmul.f32 %v803, 0.5
        %v958 = vmul.f32 %v805, 0.5
        %v959 = vmul.f32 %v807, 0.5
        %v960 = vmul.f32 %v811, 0.5
        %v961 = vmul.f32 %v813, 0.5
        %v962 = vmul.f32 %v815, 0.5
        %v963 = vmul.f32 %v817, 0.5
        %v964 = vmul.f32 %v741, 0.044715
        %v965 = vmul.f32 %v743, 0.044715
        %v966 = vmul.f32 %v745, 0.044715
        %v967 = vmul.f32 %v747, 0.044715
        %v968 = vmul.f32 %v751, 0.044715
        %v969 = vmul.f32 %v753, 0.044715
        %v970 = vmul.f32 %v755, 0.044715
        %v971 = vmul.f32 %v757, 0.044715
        %v972 = vmul.f32 %v761, 0.044715
        %v973 = vmul.f32 %v763, 0.044715
        %v974 = vmul.f32 %v765, 0.044715
        %v975 = vmul.f32 %v767, 0.044715
        %v976 = vmul.f32 %v771, 0.044715
        %v977 = vmul.f32 %v773, 0.044715
        %v978 = vmul.f32 %v775, 0.044715
        %v979 = vmul.f32 %v777, 0.044715
        %v980 = vmul.f32 %v781, 0.044715
        %v981 = vmul.f32 %v783, 0.044715
        %v982 = vmul.f32 %v785, 0.044715
        %v983 = vmul.f32 %v787, 0.044715
        %v984 = vmul.f32 %v791, 0.044715
        %v985 = vmul.f32 %v793, 0.044715
        %v986 = vmul.f32 %v795, 0.044715
        %v987 = vmul.f32 %v797, 0.044715
        %v988 = vmul.f32 %v801, 0.044715
        %v989 = vmul.f32 %v803, 0.044715
        %v990 = vmul.f32 %v805, 0.044715
        %v991 = vmul.f32 %v807, 0.044715
        %v992 = vmul.f32 %v811, 0.044715
        %v993 = vmul.f32 %v813, 0.044715
        %v994 = vmul.f32 %v815, 0.044715
        %v995 = vmul.f32 %v817, 0.044715
        %v996 = vmul.f32 %v964, %v741
        %v997 = vmul.f32 %v965, %v743
        %v998 = vmul.f32 %v966, %v745
        %v999 = vmul.f32 %v967, %v747
        %v1000 = vmul.f32 %v968, %v751
        %v1001 = vmul.f32 %v969, %v753
        %v1002 = vmul.f32 %v970, %v755
        %v1003 = vmul.f32 %v971, %v757
        %v1004 = vmul.f32 %v972, %v761
        %v1005 = vmul.f32 %v973, %v763
        %v1006 = vmul.f32 %v974, %v765
        %v1007 = vmul.f32 %v975, %v767
        %v1008 = vmul.f32 %v976, %v771
        %v1009 = vmul.f32 %v977, %v773
        %v1010 = vmul.f32 %v978, %v775
        %v1011 = vmul.f32 %v979, %v777
        %v1012 = vmul.f32 %v980, %v781
        %v1013 = vmul.f32 %v981, %v783
        %v1014 = vmul.f32 %v982, %v785
        %v1015 = vmul.f32 %v983, %v787
        %v1016 = vmul.f32 %v984, %v791
        %v1017 = vmul.f32 %v985, %v793
        %v1018 = vmul.f32 %v986, %v795
        %v1019 = vmul.f32 %v987, %v797
        %v1020 = vmul.f32 %v988, %v801
        %v1021 = vmul.f32 %v989, %v803
        %v1022 = vmul.f32 %v990, %v805
        %v1023 = vmul.f32 %v991, %v807
        %v1024 = vmul.f32 %v992, %v811
        %v1025 = vmul.f32 %v993, %v813
        %v1026 = vmul.f32 %v994, %v815
        %v1027 = vmul.f32 %v995, %v817
        %v1028 = vmul.f32 %v996, %v741
        %v1029 = vmul.f32 %v997, %v743
        %v1030 = vmul.f32 %v998, %v745
        %v1031 = vmul.f32 %v999, %v747
        %v1032 = vmul.f32 %v1000, %v751
        %v1033 = vmul.f32 %v1001, %v753
        %v1034 = vmul.f32 %v1002, %v755
        %v1035 = vmul.f32 %v1003, %v757
        %v1036 = vmul.f32 %v1004, %v761
        %v1037 = vmul.f32 %v1005, %v763
        %v1038 = vmul.f32 %v1006, %v765
        %v1039 = vmul.f32 %v1007, %v767
        %v1040 = vmul.f32 %v1008, %v771
        %v1041 = vmul.f32 %v1009, %v773
        %v1042 = vmul.f32 %v1010, %v775
        %v1043 = vmul.f32 %v1011, %v777
        %v1044 = vmul.f32 %v1012, %v781
        %v1045 = vmul.f32 %v1013, %v783
        %v1046 = vmul.f32 %v1014, %v785
        %v1047 = vmul.f32 %v1015, %v787
        %v1048 = vmul.f32 %v1016, %v791
        %v1049 = vmul.f32 %v1017, %v793
        %v1050 = vmul.f32 %v1018, %v795
        %v1051 = vmul.f32 %v1019, %v797
        %v1052 = vmul.f32 %v1020, %v801
        %v1053 = vmul.f32 %v1021, %v803
        %v1054 = vmul.f32 %v1022, %v805
        %v1055 = vmul.f32 %v1023, %v807
        %v1056 = vmul.f32 %v1024, %v811
        %v1057 = vmul.f32 %v1025, %v813
        %v1058 = vmul.f32 %v1026, %v815
        %v1059 = vmul.f32 %v1027, %v817
        %v1060 = vadd.f32 %v741, %v1028
        %v1061 = vadd.f32 %v743, %v1029
        %v1062 = vadd.f32 %v745, %v1030
        %v1063 = vadd.f32 %v747, %v1031
        %v1064 = vadd.f32 %v751, %v1032
        %v1065 = vadd.f32 %v753, %v1033
        %v1066 = vadd.f32 %v755, %v1034
        %v1067 = vadd.f32 %v757, %v1035
        %v1068 = vadd.f32 %v761, %v1036
        %v1069 = vadd.f32 %v763, %v1037
        %v1070 = vadd.f32 %v765, %v1038
        %v1071 = vadd.f32 %v767, %v1039
        %v1072 = vadd.f32 %v771, %v1040
        %v1073 = vadd.f32 %v773, %v1041
        %v1074 = vadd.f32 %v775, %v1042
        %v1075 = vadd.f32 %v777, %v1043
        %v1076 = vadd.f32 %v781, %v1044
        %v1077 = vadd.f32 %v783, %v1045
        %v1078 = vadd.f32 %v785, %v1046
        %v1079 = vadd.f32 %v787, %v1047
        %v1080 = vadd.f32 %v791, %v1048
        %v1081 = vadd.f32 %v793, %v1049
        %v1082 = vadd.f32 %v795, %v1050
        %v1083 = vadd.f32 %v797, %v1051
        %v1084 = vadd.f32 %v801, %v1052
        %v1085 = vadd.f32 %v803, %v1053
        %v1086 = vadd.f32 %v805, %v1054
        %v1087 = vadd.f32 %v807, %v1055
        %v1088 = vadd.f32 %v811, %v1056
        %v1089 = vadd.f32 %v813, %v1057
        %v1090 = vadd.f32 %v815, %v1058
        %v1091 = vadd.f32 %v817, %v1059
        %v1092 = vmul.f32 %v1060, 0.7978846
        %v1093 = vmul.f32 %v1061, 0.7978846
        %v1094 = vmul.f32 %v1062, 0.7978846
        %v1095 = vmul.f32 %v1063, 0.7978846
        %v1096 = vmul.f32 %v1064, 0.7978846
        %v1097 = vmul.f32 %v1065, 0.7978846
        %v1098 = vmul.f32 %v1066, 0.7978846
        %v1099 = vmul.f32 %v1067, 0.7978846
        %v1100 = vmul.f32 %v1068, 0.7978846
        %v1101 = vmul.f32 %v1069, 0.7978846
        %v1102 = vmul.f32 %v1070, 0.7978846
        %v1103 = vmul.f32 %v1071, 0.7978846
        %v1104 = vmul.f32 %v1072, 0.7978846
        %v1105 = vmul.f32 %v1073, 0.7978846
        %v1106 = vmul.f32 %v1074, 0.7978846
        %v1107 = vmul.f32 %v1075, 0.7978846
        %v1108 = vmul.f32 %v1076, 0.7978846
        %v1109 = vmul.f32 %v1077, 0.7978846
        %v1110 = vmul.f32 %v1078, 0.7978846
        %v1111 = vmul.f32 %v1079, 0.7978846
        %v1112 = vmul.f32 %v1080, 0.7978846
        %v1113 = vmul.f32 %v1081, 0.7978846
        %v1114 = vmul.f32 %v1082, 0.7978846
        %v1115 = vmul.f32 %v1083, 0.7978846
        %v1116 = vmul.f32 %v1084, 0.7978846
        %v1117 = vmul.f32 %v1085, 0.7978846
        %v1118 = vmul.f32 %v1086, 0.7978846
        %v1119 = vmul.f32 %v1087, 0.7978846
        %v1120 = vmul.f32 %v1088, 0.7978846
        %v1121 = vmul.f32 %v1089, 0.7978846
        %v1122 = vmul.f32 %v1090, 0.7978846
        %v1123 = vmul.f32 %v1091, 0.7978846
        %v1124 = vtanh.pop %v1092
        %v1125 = vtanh.pop %v1093
        %v1126 = vtanh.pop %v1094
        %v1127 = vtanh.pop %v1095
        %v1128 = vtanh.pop %v1096
        %v1129 = vtanh.pop %v1097
        %v1130 = vtanh.pop %v1098
        %v1131 = vtanh.pop %v1099
        %v1132 = vtanh.pop %v1100
        %v1133 = vtanh.pop %v1101
        %v1134 = vtanh.pop %v1102
        %v1135 = vtanh.pop %v1103
        %v1136 = vtanh.pop %v1104
        %v1137 = vtanh.pop %v1105
        %v1138 = vtanh.pop %v1106
        %v1139 = vtanh.pop %v1107
        %v1140 = vtanh.pop %v1108
        %v1141 = vtanh.pop %v1109
        %v1142 = vtanh.pop %v1110
        %v1143 = vtanh.pop %v1111
        %v1144 = vtanh.pop %v1112
        %v1145 = vtanh.pop %v1113
        %v1146 = vtanh.pop %v1114
        %v1147 = vtanh.pop %v1115
        %v1148 = vtanh.pop %v1116
        %v1149 = vtanh.pop %v1117
        %v1150 = vtanh.pop %v1118
        %v1151 = vtanh.pop %v1119
        %v1152 = vtanh.pop %v1120
        %v1153 = vtanh.pop %v1121
        %v1154 = vtanh.pop %v1122
        %v1155 = vtanh.pop %v1123
        %v1156 = vadd.f32 %v1124, 1.0
        %v1157 = vadd.f32 %v1125, 1.0
        %v1158 = vadd.f32 %v1126, 1.0
        %v1159 = vadd.f32 %v1127, 1.0
        %v1160 = vadd.f32 %v1128, 1.0
        %v1161 = vadd.f32 %v1129, 1.0
        %v1162 = vadd.f32 %v1130, 1.0
        %v1163 = vadd.f32 %v1131, 1.0
        %v1164 = vadd.f32 %v1132, 1.0
        %v1165 = vadd.f32 %v1133, 1.0
        %v1166 = vadd.f32 %v1134, 1.0
        %v1167 = vadd.f32 %v1135, 1.0
        %v1168 = vadd.f32 %v1136, 1.0
        %v1169 = vadd.f32 %v1137, 1.0
        %v1170 = vadd.f32 %v1138, 1.0
        %v1171 = vadd.f32 %v1139, 1.0
        %v1172 = vadd.f32 %v1140, 1.0
        %v1173 = vadd.f32 %v1141, 1.0
        %v1174 = vadd.f32 %v1142, 1.0
        %v1175 = vadd.f32 %v1143, 1.0
        %v1176 = vadd.f32 %v1144, 1.0
        %v1177 = vadd.f32 %v1145, 1.0
        %v1178 = vadd.f32 %v1146, 1.0
        %v1179 = vadd.f32 %v1147, 1.0
        %v1180 = vadd.f32 %v1148, 1.0
        %v1181 = vadd.f32 %v1149, 1.0
        %v1182 = vadd.f32 %v1150, 1.0
        %v1183 = vadd.f32 %v1151, 1.0
        %v1184 = vadd.f32 %v1152, 1.0
        %v1185 = vadd.f32 %v1153, 1.0
        %v1186 = vadd.f32 %v1154, 1.0
        %v1187 = vadd.f32 %v1155, 1.0
        %v1188 = vmul.f32 %v932, %v1156
        %v1189 = vmul.f32 %v933, %v1157
        %v1190 = vmul.f32 %v934, %v1158
        %v1191 = vmul.f32 %v935, %v1159
        %v1192 = vmul.f32 %v936, %v1160
        %v1193 = vmul.f32 %v937, %v1161
        %v1194 = vmul.f32 %v938, %v1162
        %v1195 = vmul.f32 %v939, %v1163
        %v1196 = vmul.f32 %v940, %v1164
        %v1197 = vmul.f32 %v941, %v1165
        %v1198 = vmul.f32 %v942, %v1166
        %v1199 = vmul.f32 %v943, %v1167
        %v1200 = vmul.f32 %v944, %v1168
        %v1201 = vmul.f32 %v945, %v1169
        %v1202 = vmul.f32 %v946, %v1170
        %v1203 = vmul.f32 %v947, %v1171
        %v1204 = vmul.f32 %v948, %v1172
        %v1205 = vmul.f32 %v949, %v1173
        %v1206 = vmul.f32 %v950, %v1174
        %v1207 = vmul.f32 %v951, %v1175
        %v1208 = vmul.f32 %v952, %v1176
        %v1209 = vmul.f32 %v953, %v1177
        %v1210 = vmul.f32 %v954, %v1178
        %v1211 = vmul.f32 %v955, %v1179
        %v1212 = vmul.f32 %v956, %v1180
        %v1213 = vmul.f32 %v957, %v1181
        %v1214 = vmul.f32 %v958, %v1182
        %v1215 = vmul.f32 %v959, %v1183
        %v1216 = vmul.f32 %v960, %v1184
        %v1217 = vmul.f32 %v961, %v1185
        %v1218 = vmul.f32 %v962, %v1186
        %v1219 = vmul.f32 %v963, %v1187
        %v1220 = vmul.f32 %v1188, %v854
        %v1221 = vmul.f32 %v1189, %v856
        %v1222 = vmul.f32 %v1190, %v858
        %v1223 = vmul.f32 %v1191, %v860
        %v1224 = vmul.f32 %v1192, %v864
        %v1225 = vmul.f32 %v1193, %v866
        %v1226 = vmul.f32 %v1194, %v868
        %v1227 = vmul.f32 %v1195, %v870
        %v1228 = vmul.f32 %v1196, %v874
        %v1229 = vmul.f32 %v1197, %v876
        %v1230 = vmul.f32 %v1198, %v878
        %v1231 = vmul.f32 %v1199, %v880
        %v1232 = vmul.f32 %v1200, %v884
        %v1233 = vmul.f32 %v1201, %v886
        %v1234 = vmul.f32 %v1202, %v888
        %v1235 = vmul.f32 %v1203, %v890
        %v1236 = vmul.f32 %v1204, %v894
        %v1237 = vmul.f32 %v1205, %v896
        %v1238 = vmul.f32 %v1206, %v898
        %v1239 = vmul.f32 %v1207, %v900
        %v1240 = vmul.f32 %v1208, %v904
        %v1241 = vmul.f32 %v1209, %v906
        %v1242 = vmul.f32 %v1210, %v908
        %v1243 = vmul.f32 %v1211, %v910
        %v1244 = vmul.f32 %v1212, %v914
        %v1245 = vmul.f32 %v1213, %v916
        %v1246 = vmul.f32 %v1214, %v918
        %v1247 = vmul.f32 %v1215, %v920
        %v1248 = vmul.f32 %v1216, %v924
        %v1249 = vmul.f32 %v1217, %v926
        %v1250 = vmul.f32 %v1218, %v928
        %v1251 = vmul.f32 %v1219, %v930
        %v1252 = vpack.c.bf16 %v1222, %v1220
        %v1253 = vpack.c.bf16 %v1223, %v1221
        %v1254 = vpack.c.bf16 %v1226, %v1224
        %v1255 = vpack.c.bf16 %v1227, %v1225
        %v1256 = vpack.c.bf16 %v1230, %v1228
        %v1257 = vpack.c.bf16 %v1231, %v1229
        %v1258 = vpack.c.bf16 %v1234, %v1232
        %v1259 = vpack.c.bf16 %v1235, %v1233
        %v1260 = vpack.c.bf16 %v1238, %v1236
        %v1261 = vpack.c.bf16 %v1239, %v1237
        %v1262 = vpack.c.bf16 %v1242, %v1240
        %v1263 = vpack.c.bf16 %v1243, %v1241
        %v1264 = vpack.c.bf16 %v1246, %v1244
        %v1265 = vpack.c.bf16 %v1247, %v1245
        %v1266 = vpack.c.bf16 %v1250, %v1248
        %v1267 = vpack.c.bf16 %v1251, %v1249
        %v1268 = vld [vmem:[#allocation3] sm:$0xff]
        %v1269 = vld [vmem:[#allocation3 + $0x8] sm:$0xff]
        %v1270 = vld [vmem:[#allocation3 + $0x10] sm:$0xff]
        %v1271 = vld [vmem:[#allocation3 + $0x18] sm:$0xff]
        %v1272 = vld [vmem:[#allocation3 + $0x20] sm:$0xff]
        %v1273 = vld [vmem:[#allocation3 + $0x28] sm:$0xff]
        %v1274 = vld [vmem:[#allocation3 + $0x30] sm:$0xff]
        %v1275 = vld [vmem:[#allocation3 + $0x38] sm:$0xff]
        %v1276 = vld [vmem:[#allocation3 + $0x40] sm:$0xff]
        %v1277 = vld [vmem:[#allocation3 + $0x48] sm:$0xff]
        %v1278 = vld [vmem:[#allocation3 + $0x50] sm:$0xff]
        %v1279 = vld [vmem:[#allocation3 + $0x58] sm:$0xff]
        %v1280 = vld [vmem:[#allocation3 + $0x60] sm:$0xff]
        %v1281 = vld [vmem:[#allocation3 + $0x68] sm:$0xff]
        %v1282 = vld [vmem:[#allocation3 + $0x70] sm:$0xff]
        %v1283 = vld [vmem:[#allocation3 + $0x78] sm:$0xff]
        %v1284 = vld [vmem:[%s280] sm:$0xf]
        %v1285 = vld [vmem:[%s280 + $0x4] sm:$0xf]
        %v1286 = vld [vmem:[%s280 + $0x8] sm:$0xf]
        %v1287 = vld [vmem:[%s280 + $0xc] sm:$0xf]
        %v1288 = vld [vmem:[%s280 + $0x10] sm:$0xf]
        %v1289 = vld [vmem:[%s280 + $0x14] sm:$0xf]
        %v1290 = vld [vmem:[%s280 + $0x18] sm:$0xf]
        %v1291 = vld [vmem:[%s280 + $0x1c] sm:$0xf]
        %v1292 = vld [vmem:[%s280 + $0x20] sm:$0xf]
        %v1293 = vld [vmem:[%s280 + $0x24] sm:$0xf]
        %v1294 = vld [vmem:[%s280 + $0x28] sm:$0xf]
        %v1295 = vld [vmem:[%s280 + $0x2c] sm:$0xf]
        %v1296 = vld [vmem:[%s280 + $0x30] sm:$0xf]
        %v1297 = vld [vmem:[%s280 + $0x34] sm:$0xf]
        %v1298 = vld [vmem:[%s280 + $0x38] sm:$0xf]
        %v1299 = vld [vmem:[%s280 + $0x3c] sm:$0xf]
        %v1300 = vld [vmem:[%s280 + $0x40] sm:$0xf]
        %v1301 = vld [vmem:[%s280 + $0x44] sm:$0xf]
        %v1302 = vld [vmem:[%s280 + $0x48] sm:$0xf]
        %v1303 = vld [vmem:[%s280 + $0x4c] sm:$0xf]
        %v1304 = vld [vmem:[%s280 + $0x50] sm:$0xf]
        %v1305 = vld [vmem:[%s280 + $0x54] sm:$0xf]
        %v1306 = vld [vmem:[%s280 + $0x58] sm:$0xf]
        %v1307 = vld [vmem:[%s280 + $0x5c] sm:$0xf]
        %v1308 = vld [vmem:[%s280 + $0x60] sm:$0xf]
        %v1309 = vld [vmem:[%s280 + $0x64] sm:$0xf]
        %v1310 = vld [vmem:[%s280 + $0x68] sm:$0xf]
        %v1311 = vld [vmem:[%s280 + $0x6c] sm:$0xf]
        %v1312 = vld [vmem:[%s280 + $0x70] sm:$0xf]
        %v1313 = vld [vmem:[%s280 + $0x74] sm:$0xf]
        %v1314 = vld [vmem:[%s280 + $0x78] sm:$0xf]
        %v1315 = vld [vmem:[%s280 + $0x7c] sm:$0xf]
        %v1348 = vunpack.c.l.b16 %v1284
        %v1349 = vunpack.c.l.b16 %v1285
        %v1350 = vunpack.c.l.b16 %v1286
        %v1351 = vunpack.c.l.b16 %v1287
        %v1352 = vunpack.c.l.b16 %v1288
        %v1353 = vunpack.c.l.b16 %v1289
        %v1354 = vunpack.c.l.b16 %v1290
        %v1355 = vunpack.c.l.b16 %v1291
        %v1356 = vunpack.c.l.b16 %v1292
        %v1357 = vunpack.c.l.b16 %v1293
        %v1358 = vunpack.c.l.b16 %v1294
        %v1359 = vunpack.c.l.b16 %v1295
        %v1360 = vunpack.c.l.b16 %v1296
        %v1361 = vunpack.c.l.b16 %v1297
        %v1362 = vunpack.c.l.b16 %v1298
        %v1363 = vunpack.c.l.b16 %v1299
        %v1364 = vunpack.c.l.b16 %v1300
        %v1365 = vunpack.c.l.b16 %v1301
        %v1366 = vunpack.c.l.b16 %v1302
        %v1367 = vunpack.c.l.b16 %v1303
        %v1368 = vunpack.c.l.b16 %v1304
        %v1369 = vunpack.c.l.b16 %v1305
        %v1370 = vunpack.c.l.b16 %v1306
        %v1371 = vunpack.c.l.b16 %v1307
        %v1372 = vunpack.c.l.b16 %v1308
        %v1373 = vunpack.c.l.b16 %v1309
        %v1374 = vunpack.c.l.b16 %v1310
        %v1375 = vunpack.c.l.b16 %v1311
        %v1376 = vunpack.c.l.b16 %v1312
        %v1377 = vunpack.c.l.b16 %v1313
        %v1378 = vunpack.c.l.b16 %v1314
        %v1379 = vunpack.c.l.b16 %v1315
        %v1380 = vpack.c.b16 %v1349, %v1348
        %v1381 = vpack.c.b16 %v1351, %v1350
        %v1382 = vpack.c.b16 %v1353, %v1352
        %v1383 = vpack.c.b16 %v1355, %v1354
        %v1384 = vpack.c.b16 %v1357, %v1356
        %v1385 = vpack.c.b16 %v1359, %v1358
        %v1386 = vpack.c.b16 %v1361, %v1360
        %v1387 = vpack.c.b16 %v1363, %v1362
        %v1388 = vpack.c.b16 %v1365, %v1364
        %v1389 = vpack.c.b16 %v1367, %v1366
        %v1390 = vpack.c.b16 %v1369, %v1368
        %v1391 = vpack.c.b16 %v1371, %v1370
        %v1392 = vpack.c.b16 %v1373, %v1372
        %v1393 = vpack.c.b16 %v1375, %v1374
        %v1394 = vpack.c.b16 %v1377, %v1376
        %v1395 = vpack.c.b16 %v1379, %v1378
        %1412 = vmatprep.subr.bf16.mxu0 0
        %1413 = vmatpush1.bf16.msra.mxu0 %v1380
        %1414 = vmatprep.subr.bf16.mxu0 0
        %1415 = vmatpush1.bf16.msra.mxu0 %v1381
        %1416 = vmatprep.subr.bf16.mxu0 0
        %1417 = vmatpush1.bf16.msra.mxu0 %v1382
        %1418 = vmatprep.subr.bf16.mxu0 0
        %1419 = vmatpush1.bf16.msra.mxu0 %v1383
        %1420 = vmatprep.subr.bf16.mxu0 0
        %1421 = vmatpush1.bf16.msra.mxu0 %v1384
        %1422 = vmatprep.subr.bf16.mxu0 0
        %1423 = vmatpush1.bf16.msra.mxu0 %v1385
        %1424 = vmatprep.subr.bf16.mxu0 0
        %1425 = vmatpush1.bf16.msra.mxu0 %v1386
        %1426 = vmatprep.subr.bf16.mxu0 0
        %1427 = vmatpush1.bf16.msra.mxu0 %v1387
        %1428 = vmatprep.subr.bf16.mxu0 0
        %1429 = vmatpush1.bf16.msra.mxu0 %v1388
        %1430 = vmatprep.subr.bf16.mxu0 0
        %1431 = vmatpush1.bf16.msra.mxu0 %v1389
        %1432 = vmatprep.subr.bf16.mxu0 0
        %1433 = vmatpush1.bf16.msra.mxu0 %v1390
        %1434 = vmatprep.subr.bf16.mxu0 0
        %1435 = vmatpush1.bf16.msra.mxu0 %v1391
        %1436 = vmatprep.subr.bf16.mxu0 0
        %1437 = vmatpush1.bf16.msra.mxu0 %v1392
        %1438 = vmatprep.subr.bf16.mxu0 0
        %1439 = vmatpush1.bf16.msra.mxu0 %v1393
        %1440 = vmatprep.subr.bf16.mxu0 0
        %1441 = vmatpush1.bf16.msra.mxu0 %v1394
        %1442 = vmatprep.subr.bf16.mxu0 0
        %1443 = vmatpush1.bf16.msra.mxu0 %v1395
        %1444 = vmatprep.mubr.bf16.mxu0 %v1253
        %1445 = vmatmul.mubr.bf16.gmra.mrb[0].mxu0 %v1252
        %v1446 = vpop.f32.mrb[0].mxu0
        %v1447 = vadd.f32 0.0, %v1446
        %v1448 = vpop.f32.mrb[0].mxu0
        %v1449 = vpop.f32.mrb[0].mxu0
        %v1450 = vadd.f32 0.0, %v1449
        %v1451 = vpop.f32.mrb[0].mxu0
        %1452 = vmatprep.mubr.bf16.mxu0 %v1255
        %1453 = vmatmul.mubr.bf16.gmra.mrb[0].mxu0 %v1254
        %v1454 = vpop.f32.mrb[0].mxu0
        %v1455 = vadd.f32 0.0, %v1454
        %v1456 = vpop.f32.mrb[0].mxu0
        %v1457 = vpop.f32.mrb[0].mxu0
        %v1458 = vadd.f32 0.0, %v1457
        %v1459 = vpop.f32.mrb[0].mxu0
        %1460 = vmatprep.mubr.bf16.mxu0 %v1257
        %1461 = vmatmul.mubr.bf16.gmra.mrb[0].mxu0 %v1256
        %v1462 = vpop.f32.mrb[0].mxu0
        %v1463 = vadd.f32 0.0, %v1462
        %v1464 = vpop.f32.mrb[0].mxu0
        %v1465 = vpop.f32.mrb[0].mxu0
        %v1466 = vadd.f32 0.0, %v1465
        %v1467 = vpop.f32.mrb[0].mxu0
        %1468 = vmatprep.mubr.bf16.mxu0 %v1259
        %1469 = vmatmul.mubr.bf16.gmra.mrb[0].mxu0 %v1258
        %v1470 = vpop.f32.mrb[0].mxu0
        %v1471 = vadd.f32 0.0, %v1470
        %v1472 = vpop.f32.mrb[0].mxu0
        %v1473 = vpop.f32.mrb[0].mxu0
        %v1474 = vadd.f32 0.0, %v1473
        %v1475 = vpop.f32.mrb[0].mxu0
        %1476 = vmatprep.mubr.bf16.mxu0 %v1261
        %1477 = vmatmul.mubr.bf16.gmra.mrb[0].mxu0 %v1260
        %v1478 = vpop.f32.mrb[0].mxu0
        %v1479 = vadd.f32 0.0, %v1478
        %v1480 = vpop.f32.mrb[0].mxu0
        %v1481 = vpop.f32.mrb[0].mxu0
        %v1482 = vadd.f32 0.0, %v1481
        %v1483 = vpop.f32.mrb[0].mxu0
        %1484 = vmatprep.mubr.bf16.mxu0 %v1263
        %1485 = vmatmul.mubr.bf16.gmra.mrb[0].mxu0 %v1262
        %v1486 = vpop.f32.mrb[0].mxu0
        %v1487 = vadd.f32 0.0, %v1486
        %v1488 = vpop.f32.mrb[0].mxu0
        %v1489 = vpop.f32.mrb[0].mxu0
        %v1490 = vadd.f32 0.0, %v1489
        %v1491 = vpop.f32.mrb[0].mxu0
        %1492 = vmatprep.mubr.bf16.mxu0 %v1265
        %1493 = vmatmul.mubr.bf16.gmra.mrb[0].mxu0 %v1264
        %v1494 = vpop.f32.mrb[0].mxu0
        %v1495 = vadd.f32 0.0, %v1494
        %v1496 = vpop.f32.mrb[0].mxu0
        %v1497 = vpop.f32.mrb[0].mxu0
        %v1498 = vadd.f32 0.0, %v1497
        %v1499 = vpop.f32.mrb[0].mxu0
        %1500 = vmatprep.mubr.bf16.mxu0 %v1267
        %1501 = vmatmul.mubr.bf16.gmra.mrb[0].mxu0 %v1266
        %v1502 = vpop.f32.mrb[0].mxu0
        %v1503 = vadd.f32 0.0, %v1502
        %v1504 = vpop.f32.mrb[0].mxu0
        %v1505 = vpop.f32.mrb[0].mxu0
        %v1506 = vadd.f32 0.0, %v1505
        %v1507 = vpop.f32.mrb[0].mxu0
        %1508 = vdwg.mxu0
        %v1509 = vadd.f32 %v1268, %v1447
        %v1510 = vadd.f32 %v1269, %v1450
        %v1511 = vadd.f32 %v1270, %v1455
        %v1512 = vadd.f32 %v1271, %v1458
        %v1513 = vadd.f32 %v1272, %v1463
        %v1514 = vadd.f32 %v1273, %v1466
        %v1515 = vadd.f32 %v1274, %v1471
        %v1516 = vadd.f32 %v1275, %v1474
        %v1517 = vadd.f32 %v1276, %v1479
        %v1518 = vadd.f32 %v1277, %v1482
        %v1519 = vadd.f32 %v1278, %v1487
        %v1520 = vadd.f32 %v1279, %v1490
        %v1521 = vadd.f32 %v1280, %v1495
        %v1522 = vadd.f32 %v1281, %v1498
        %v1523 = vadd.f32 %v1282, %v1503
        %v1524 = vadd.f32 %v1283, %v1506
        %1525 = vst [vmem:[#allocation3] sm:$0xff] %v1509
        %1526 = vst [vmem:[#allocation3 + $0x8] sm:$0xff] %v1510
        %1527 = vst [vmem:[#allocation3 + $0x10] sm:$0xff] %v1511
        %1528 = vst [vmem:[#allocation3 + $0x18] sm:$0xff] %v1512
        %1529 = vst [vmem:[#allocation3 + $0x20] sm:$0xff] %v1513
        %1530 = vst [vmem:[#allocation3 + $0x28] sm:$0xff] %v1514
        %1531 = vst [vmem:[#allocation3 + $0x30] sm:$0xff] %v1515
        %1532 = vst [vmem:[#allocation3 + $0x38] sm:$0xff] %v1516
        %1533 = vst [vmem:[#allocation3 + $0x40] sm:$0xff] %v1517
        %1534 = vst [vmem:[#allocation3 + $0x48] sm:$0xff] %v1518
        %1535 = vst [vmem:[#allocation3 + $0x50] sm:$0xff] %v1519
        %1536 = vst [vmem:[#allocation3 + $0x58] sm:$0xff] %v1520
        %1537 = vst [vmem:[#allocation3 + $0x60] sm:$0xff] %v1521
        %1538 = vst [vmem:[#allocation3 + $0x68] sm:$0xff] %v1522
        %1539 = vst [vmem:[#allocation3 + $0x70] sm:$0xff] %v1523
        %1540 = vst [vmem:[#allocation3 + $0x78] sm:$0xff] %v1524
        %p1541 = scmp.eq.s32.totalorder %s27, 1
        // Predicated region
        $region57: #{tpu_custom_call.1} parent=35 // pred_check
          %p1542 = pneg %p1541
        $region58: #{tpu_custom_call.1} parent=35 // pred_check_branch
          %1544 = sbr.rel (%p1542) target = $region60
        $region59: #{tpu_custom_call.1} parent=35 // pred_region
          %v1545 = vld [vmem:[%s258] sm:$0xff]
          %v1546 = vld [vmem:[%s258 + $0x8] sm:$0xff]
          %v1547 = vld [vmem:[%s258 + $0x10] sm:$0xff]
          %v1548 = vld [vmem:[%s258 + $0x18] sm:$0xff]
          %v1549 = vld [vmem:[%s258 + $0x20] sm:$0xff]
          %v1550 = vld [vmem:[%s258 + $0x28] sm:$0xff]
          %v1551 = vld [vmem:[%s258 + $0x30] sm:$0xff]
          %v1552 = vld [vmem:[%s258 + $0x38] sm:$0xff]
          %v1553 = vld [vmem:[%s258 + $0x40] sm:$0xff]
          %v1554 = vld [vmem:[%s258 + $0x48] sm:$0xff]
          %v1555 = vld [vmem:[%s258 + $0x50] sm:$0xff]
          %v1556 = vld [vmem:[%s258 + $0x58] sm:$0xff]
          %v1557 = vld [vmem:[%s258 + $0x60] sm:$0xff]
          %v1558 = vld [vmem:[%s258 + $0x68] sm:$0xff]
          %v1559 = vld [vmem:[%s258 + $0x70] sm:$0xff]
          %v1560 = vld [vmem:[%s258 + $0x78] sm:$0xff]
          %v1561 = vld [vmem:[#allocation3] sm:$0xff]
          %v1562 = vld [vmem:[#allocation3 + $0x8] sm:$0xff]
          %v1563 = vld [vmem:[#allocation3 + $0x10] sm:$0xff]
          %v1564 = vld [vmem:[#allocation3 + $0x18] sm:$0xff]
          %v1565 = vld [vmem:[#allocation3 + $0x20] sm:$0xff]
          %v1566 = vld [vmem:[#allocation3 + $0x28] sm:$0xff]
          %v1567 = vld [vmem:[#allocation3 + $0x30] sm:$0xff]
          %v1568 = vld [vmem:[#allocation3 + $0x38] sm:$0xff]
          %v1569 = vld [vmem:[#allocation3 + $0x40] sm:$0xff]
          %v1570 = vld [vmem:[#allocation3 + $0x48] sm:$0xff]
          %v1571 = vld [vmem:[#allocation3 + $0x50] sm:$0xff]
          %v1572 = vld [vmem:[#allocation3 + $0x58] sm:$0xff]
          %v1573 = vld [vmem:[#allocation3 + $0x60] sm:$0xff]
          %v1574 = vld [vmem:[#allocation3 + $0x68] sm:$0xff]
          %v1575 = vld [vmem:[#allocation3 + $0x70] sm:$0xff]
          %v1576 = vld [vmem:[#allocation3 + $0x78] sm:$0xff]
          %v1577 = vadd.f32 %v1545, %v1561
          %v1578 = vadd.f32 %v1546, %v1562
          %v1579 = vadd.f32 %v1547, %v1563
          %v1580 = vadd.f32 %v1548, %v1564
          %v1581 = vadd.f32 %v1549, %v1565
          %v1582 = vadd.f32 %v1550, %v1566
          %v1583 = vadd.f32 %v1551, %v1567
          %v1584 = vadd.f32 %v1552, %v1568
          %v1585 = vadd.f32 %v1553, %v1569
          %v1586 = vadd.f32 %v1554, %v1570
          %v1587 = vadd.f32 %v1555, %v1571
          %v1588 = vadd.f32 %v1556, %v1572
          %v1589 = vadd.f32 %v1557, %v1573
          %v1590 = vadd.f32 %v1558, %v1574
          %v1591 = vadd.f32 %v1559, %v1575
          %v1592 = vadd.f32 %v1560, %v1576
          %1593 = vst [vmem:[%s314] sm:$0xff] %v1577
          %1594 = vst [vmem:[%s314 + $0x8] sm:$0xff] %v1578
          %1595 = vst [vmem:[%s314 + $0x10] sm:$0xff] %v1579
          %1596 = vst [vmem:[%s314 + $0x18] sm:$0xff] %v1580
          %1597 = vst [vmem:[%s314 + $0x20] sm:$0xff] %v1581
          %1598 = vst [vmem:[%s314 + $0x28] sm:$0xff] %v1582
          %1599 = vst [vmem:[%s314 + $0x30] sm:$0xff] %v1583
          %1600 = vst [vmem:[%s314 + $0x38] sm:$0xff] %v1584
          %1601 = vst [vmem:[%s314 + $0x40] sm:$0xff] %v1585
          %1602 = vst [vmem:[%s314 + $0x48] sm:$0xff] %v1586
          %1603 = vst [vmem:[%s314 + $0x50] sm:$0xff] %v1587
          %1604 = vst [vmem:[%s314 + $0x58] sm:$0xff] %v1588
          %1605 = vst [vmem:[%s314 + $0x60] sm:$0xff] %v1589
          %1606 = vst [vmem:[%s314 + $0x68] sm:$0xff] %v1590
          %1607 = vst [vmem:[%s314 + $0x70] sm:$0xff] %v1591
          %1608 = vst [vmem:[%s314 + $0x78] sm:$0xff] %v1592
        $region60: #{tpu_custom_call.1} parent=35 // pred_fallthru
          _
        %s1609 = sand.u32 %s141, 1
        %s1610 = scalar_lea.sflag [#allocation6], %s1609
        %s1611 = sand.u32 %s141, 1
        %s1612 = smul.addr %s1611, 128
        %s1613 = scalar_lea.vmem [#allocation11], %s1612
        // Predicated region
        $region61: #{tpu_custom_call.1} parent=35 // pred_check
          %p1614 = pneg %p151
        $region62: #{tpu_custom_call.1} parent=35 // pred_check_branch
          %1616 = sbr.rel (%p1614) target = $region64
        $region63: #{tpu_custom_call.1} parent=35 // pred_region
          %s1617 = smul.u32 16, %s26
          %s1619 = ssub.s32 2048, 2048
          %1620 = vsyncadd %s1610, %s1619
          %s1621 = smul.addr %s1617, 128
          %s1622 = scalar_lea.hbm %s4, %s1621
          %s1623 = sshll.u32 %s1613, 4
          %s1624 = int_to_ptr.vmem [resolvable:$true] %s1623
          %1629 = dma.vmem_to_hbm [thread:$0]  %s1624, 2048, %s1622, %s1610, 128, 128, 8
        $region64: #{tpu_custom_call.1} parent=35 // pred_fallthru
          _
      $region36: #{tpu_custom_call.1} parent=5 // pred_fallthru
        _
      %p1630 = scmp.le.s32.totalorder 2, %s17
      // Predicated region
      $region65: #{tpu_custom_call.1} parent=5 // pred_check
        %p1631 = pneg %p1630
      $region66: #{tpu_custom_call.1} parent=5 // pred_check_branch
        %1633 = sbr.rel (%p1631) target = $region68
      $region67: #{tpu_custom_call.1} parent=5 // pred_region
        %s1634 = ssub.s32 %s17, 2
        // Predicated region
        $region69: #{tpu_custom_call.1} parent=67 // pred_check
          %p1635 = pneg %p157
        $region70: #{tpu_custom_call.1} parent=67 // pred_check_branch
          %1637 = sbr.rel (%p1635) target = $region72
        $region71: #{tpu_custom_call.1} parent=67 // pred_region
          %s1638 = sand.u32 %s142, 1
          %s1639 = scalar_lea.sflag [#allocation6], %s1638
          %s1640 = sand.u32 %s142, 1
          %s1641 = smul.addr %s1640, 128
          %s1642 = scalar_lea.vmem [#allocation11], %s1641
          %1643 = dma.done %s1639, 2048
        $region72: #{tpu_custom_call.1} parent=67 // pred_fallthru
          _
      $region68: #{tpu_custom_call.1} parent=5 // pred_fallthru
        _
    $region6: #{tpu_custom_call.1} parent=1 // loop_footer
      %s21 = sadd.s32 1, %s17
    $region7: #{tpu_custom_call.1} parent=1 // loop_footer_branch
      %16 = sbr.rel target = $region3
    $region8: #{tpu_custom_call.1} parent=1 // loop_exit
      _
    %1644 = vsyncpa [#allocation5], 1
    %s1645 = scalar_lea.sflag [#allocation5], 1
    %1646 = vsyncpa %s1645, 1
    %1647 = vsyncpa [#allocation8], 1
    %1648 = vsyncpa [#allocation6], 1
    %s1649 = scalar_lea.sflag [#allocation6], 1
    %1650 = vsyncpa %s1649, 1

</llo_original>
